<compile_context>
chip_gen: v7x
topology: tpu7x:2x2x1
jax: 0.10.0
libtpu: 0.0.40
codegen_flags: <defaults>
</compile_context>

<pallas_src>
import functools

import jax
import jax.numpy as jnp
from jax.experimental import pallas as pl
from jax.experimental.pallas import tpu as pltpu

IN_FEATURES = 3072        # 3 * 32 * 32
OUT_FEATURES = 10
PADDED_OUT = 128          # lane width; weight is stored zero-padded to this

# Large-batch tile: 2 x 1024 x 3072 x 4 B = 24 MiB of x double-buffers.
DEFAULT_TM = 1024
VMEM_LIMIT_BYTES = 48 * 1024 * 1024


def _svm_kernel(x_ref, w_ref, b_ref, o_ref):
    # x_ref: (TM, 3072)   w_ref: (3072, 128) zero-padded   b_ref: (1, 10)
    # o_ref: (TM, 10)
    acc = jnp.dot(x_ref[...], w_ref[...], preferred_element_type=jnp.float32)
    o_ref[...] = (acc[:, :OUT_FEATURES] + b_ref[...]).astype(o_ref.dtype)


def prepare_params(weight, bias):
    """One-time parameter prep (hoisted out of the per-call path):
    transpose (10, 3072) -> (3072, 10) and zero-pad the output dim to the
    128-lane width so the weight DMAs as one dense contiguous block."""
    w_t = weight.T.astype(jnp.float32)                       # (3072, 10)
    w_pad = jnp.zeros((IN_FEATURES, PADDED_OUT), jnp.float32)
    w_pad = w_pad.at[:, :OUT_FEATURES].set(w_t)              # (3072, 128)
    return w_pad, bias.reshape(1, OUT_FEATURES).astype(jnp.float32)


def _choose_tm(batch, tm_max):
    """Batch tile: large enough to amortize the ~0.35 us/step overhead, small
    enough that the grid has >=4 steps (>=2 per v7x TensorCore), and a multiple
    of 8 (sublane) unless it is the whole batch."""
    if batch <= 8:
        return batch                        # single block == full batch dim
    want = -(-batch // 4)                   # ceil(batch / 4): aim for 4 steps
    want = ((want + 7) // 8) * 8            # round up to a sublane multiple
    return max(8, min(tm_max, want))


@functools.partial(jax.jit, static_argnames=("tm",))
def svm_forward(x_nchw, w_pad, b2d, *, tm=DEFAULT_TM):
    """x_nchw: (B, 3, 32, 32) f32; w_pad: (3072, 128) f32; b2d: (1, 10) f32."""
    B = x_nchw.shape[0]
    # Same row-major (C, H, W) flatten order as torch.nn.Flatten.
    x2d = x_nchw.reshape(B, IN_FEATURES)

    tm_eff = _choose_tm(B, tm)
    grid = (pl.cdiv(B, tm_eff),)            # ragged last block handled by masking

    cost = pl.CostEstimate(
        flops=2 * B * IN_FEATURES * OUT_FEATURES,
        transcendentals=0,
        bytes_accessed=(B * IN_FEATURES * 4             # x read
                        + B * OUT_FEATURES * 4          # y write
                        + IN_FEATURES * PADDED_OUT * 4  # W read (once)
                        + OUT_FEATURES * 4),            # b read
    )

    return pl.pallas_call(
        _svm_kernel,
        out_shape=jax.ShapeDtypeStruct((B, OUT_FEATURES), jnp.float32),
        grid_spec=pltpu.PrefetchScalarGridSpec(
            num_scalar_prefetch=0,
            grid=grid,
            in_specs=[
                # x: streamed tile-by-tile along the batch axis (auto
                # double-buffered; partial last block is masked, no host pad).
                pl.BlockSpec((tm_eff, IN_FEATURES), lambda i: (i, 0)),
                # Weight / bias: constant block index -> copied once, then
                # VMEM-resident across the whole grid.
                pl.BlockSpec((IN_FEATURES, PADDED_OUT), lambda i: (0, 0)),
                pl.BlockSpec((1, OUT_FEATURES), lambda i: (0, 0)),
            ],
            out_specs=pl.BlockSpec((tm_eff, OUT_FEATURES), lambda i: (i, 0)),
        ),
        compiler_params=pltpu.CompilerParams(
            # Independent batch axis: lets v7x shard grid steps across its two
            # TensorCores; no-op on single-core v5e/v6e.
            dimension_semantics=("parallel",),
            # Real footprint (~29 MiB at TM=1024) exceeds v5e's 16 MiB default
            # scoped limit; raise it explicitly (fits every generation).
            vmem_limit_bytes=VMEM_LIMIT_BYTES,
        ),
        cost_estimate=cost,
    )(x2d, w_pad, b2d)


if __name__ == "__main__":
    key = jax.random.PRNGKey(0)
    kx, kw, kb, kx2 = jax.random.split(key, 4)

    # Deterministic init (mimics nn.Linear's uniform(-1/sqrt(K), 1/sqrt(K))).
    bound = 1.0 / (IN_FEATURES ** 0.5)
    weight = jax.random.uniform(
        kw, (OUT_FEATURES, IN_FEATURES), jnp.float32, -bound, bound)
    bias = jax.random.uniform(
        kb, (OUT_FEATURES,), jnp.float32, -bound, bound)
    w_pad, b2d = prepare_params(weight, bias)

    # Small batch, shapes implied by Linear(3072, 10): (B, 3, 32, 32).
    x = jax.random.normal(kx, (2, 3, 32, 32), jnp.float32)
    y = svm_forward(x, w_pad, b2d)
    jax.block_until_ready(y)
    y_ref = x.reshape(2, -1) @ weight.T + bias
    assert y.shape == (2, OUT_FEATURES)
    assert jnp.allclose(y, y_ref, atol=1e-4, rtol=1e-4)

    # Larger ragged batch: exercises the multi-step pipelined path with a
    # masked last block (B=520 -> tm=136, grid=(4,), no host-side padding).
    xb = jax.random.normal(kx2, (520, 3, 32, 32), jnp.float32)
    yb = svm_forward(xb, w_pad, b2d)
    jax.block_until_ready(yb)
    yb_ref = xb.reshape(520, -1) @ weight.T + bias
    assert yb.shape == (520, OUT_FEATURES)
    assert jnp.allclose(yb, yb_ref, atol=1e-4, rtol=1e-4)

    print("KERNEL_OK")
</pallas_src>

<mosaic_0001>
module attributes {stable_mosaic.version = 11 : i64} {
  func.func @_svm_kernel(%arg0: i32, %arg1: memref<2x3072xf32, #tpu.memory_space<vmem>>, %arg2: memref<3072x128xf32, #tpu.memory_space<vmem>>, %arg3: memref<1x10xf32, #tpu.memory_space<vmem>>, %arg4: memref<2x10xf32, #tpu.memory_space<vmem>>) attributes {dimension_semantics = [#tpu.dimension_semantics<parallel>], iteration_bounds = array<i64: 1>, scalar_prefetch = 0 : i64, scratch_operands = 0 : i64, tpu.core_type = #tpu.core_type<tc>, window_params = [{transform_indices = @transform_0, window_bounds = array<i64: 2, 3072>}, {pipeline_mode = #tpu.pipeline_mode<synchronous>, transform_indices = @transform_1, window_bounds = array<i64: 3072, 128>}, {pipeline_mode = #tpu.pipeline_mode<synchronous>, transform_indices = @transform_2, window_bounds = array<i64: 1, 10>}, {transform_indices = @transform_3, window_bounds = array<i64: 2, 10>}]} {
    %c0 = arith.constant 0 : index
    %c0_0 = arith.constant 0 : index
    %0 = vector.load %arg1[%c0, %c0_0] : memref<2x3072xf32, #tpu.memory_space<vmem>>, vector<2x3072xf32>
    %c0_1 = arith.constant 0 : index
    %c0_2 = arith.constant 0 : index
    %1 = vector.load %arg2[%c0_1, %c0_2] : memref<3072x128xf32, #tpu.memory_space<vmem>>, vector<3072x128xf32>
    %cst = arith.constant dense<0.000000e+00> : vector<2x128xf32>
    %2 = tpu.matmul %0, %1, %cst {dimension_numbers = #tpu.dot_dimension_numbers<[1], [0], [0], [1], [0, 0, 1, 1], [], []>} : vector<2x3072xf32>, vector<3072x128xf32>, vector<2x128xf32> -> vector<2x128xf32>
    %3 = vector.extract_strided_slice %2 {offsets = [0, 0], sizes = [2, 10], strides = [1, 1]} : vector<2x128xf32> to vector<2x10xf32>
    %c0_3 = arith.constant 0 : index
    %c0_4 = arith.constant 0 : index
    %4 = vector.load %arg3[%c0_3, %c0_4] : memref<1x10xf32, #tpu.memory_space<vmem>>, vector<1x10xf32>
    %5 = vector.broadcast %4 : vector<1x10xf32> to vector<2x10xf32>
    %6 = arith.addf %3, %5 : vector<2x10xf32>
    %c0_5 = arith.constant 0 : index
    %c0_6 = arith.constant 0 : index
    %7 = vector.load %arg4[%c0_5, %c0_6] : memref<2x10xf32, #tpu.memory_space<vmem>>, vector<2x10xf32>
    tpu.vector_store %arg4[%c0_5, %c0_6], %6 {strides = array<i32>} : memref<2x10xf32, #tpu.memory_space<vmem>>, vector<2x10xf32>,
    return
  }
  func.func @transform_0(%arg0: i32) -> (i32, i32) {
    %c0_i32 = arith.constant 0 : i32
    %c0_i32_0 = arith.constant 0 : i32
    return %arg0, %c0_i32 : i32, i32
  }
  func.func @transform_1(%arg0: i32) -> (i32, i32) {
    %c0_i32 = arith.constant 0 : i32
    %c0_i32_0 = arith.constant 0 : i32
    %c0_i32_1 = arith.constant 0 : i32
    return %c0_i32, %c0_i32_0 : i32, i32
  }
  func.func @transform_2(%arg0: i32) -> (i32, i32) {
    %c0_i32 = arith.constant 0 : i32
    %c0_i32_0 = arith.constant 0 : i32
    %c0_i32_1 = arith.constant 0 : i32
    return %c0_i32, %c0_i32_0 : i32, i32
  }
  func.func @transform_3(%arg0: i32) -> (i32, i32) {
    %c0_i32 = arith.constant 0 : i32
    %c0_i32_0 = arith.constant 0 : i32
    return %arg0, %c0_i32 : i32, i32
  }
}

</mosaic_0001>

<llo_original>
// kernel: svm_forward.1
$region0: #{svm_forward.1}
  #allocation0 [shape = 'u32[]', space=smem, size = 0x4, offset = 0x4, fixed_abs, tag = 'smem constant byte address 0x4 - core index']
  #allocation1 [shape = 'u32[144,128]{1,0:T(1,128)}', space=vmem, size = 0x12000, scoped, tag = 'internal scratch']
  %s0 = inlined_call_operand.vmem [shape: f32[2,3072], index: 0, kind: input, shape index: {}]
  %s1 = inlined_call_operand.hbm [shape: f32[3072,128], index: 1, kind: input, shape index: {}]
  %s2 = inlined_call_operand.hbm [shape: f32[1,10], index: 2, kind: input, shape index: {}]
  %s3 = inlined_call_operand.hbm [shape: f32[2,10], index: 3, kind: output, shape index: {}]
  %s4 = sld [smem:[#allocation0]]
  $region30: #{svm_forward.1} parent=0
    _
  %s6 = ssub.s32 1, %s4
  %s7 = scalar_select 0, %s6, %s4
  $region1: #{svm_forward.1} parent=0
    #allocation2 [shape = 'u8[1572864]{0}', space=vmem, size = 0x180000, scoped, tag = 'input window, operand 1, single buffered']
    #allocation3 [shape = 's32[1]{0}', space=sflag, size = 0x4, scoped, tag = 'scoped memory for svm_forward.1']
    #allocation4 [shape = 's32[1]{0}', space=sflag, size = 0x4, scoped, tag = 'scoped memory for svm_forward.1']
    #allocation5 [shape = 'u8[512]{0}', space=vmem, size = 0x400, scoped, tag = 'input window, operand 2, single buffered']
    #allocation6 [shape = 's32[1]{0}', space=sflag, size = 0x4, scoped, tag = 'scoped memory for svm_forward.1']
    #allocation7 [shape = 'u8[1024]{0}', space=vmem, size = 0x400, scoped, tag = 'output window, operand 0, single buffered']
    %8 = vsyncpa [#allocation3], 0
    %9 = vsyncpa [#allocation6], 0
    %10 = vsyncpa [#allocation4], 0
    // Predicated region
    $region2: #{svm_forward.1} parent=1 // pred_check
      _
    $region3: #{svm_forward.1} parent=1 // pred_check_branch
      %12 = sbr.rel (0) target = $region5
    $region4: #{svm_forward.1} parent=1 // pred_region
      _
    $region5: #{svm_forward.1} parent=1 // pred_fallthru
      _
    // Predicated region
    $region6: #{svm_forward.1} parent=1 // pred_check
      _
    $region7: #{svm_forward.1} parent=1 // pred_check_branch
      %14 = sbr.rel (0) target = $region9
    $region8: #{svm_forward.1} parent=1 // pred_region
      %s16 = ssub.s32 49152, 49152
      %17 = vsyncadd [#allocation3], %s16
      %s18 = sshll.u32 [#allocation2], 4
      %s19 = int_to_ptr.vmem [resolvable:$true] %s18
      %24 = dma.hbm_to_vmem [thread:$0]  %s1, 49152, %s19, [#allocation3], 128, 128, 8
    $region9: #{svm_forward.1} parent=1 // pred_fallthru
      _
    // Predicated region
    $region10: #{svm_forward.1} parent=1 // pred_check
      _
    $region11: #{svm_forward.1} parent=1 // pred_check_branch
      %26 = sbr.rel (0) target = $region13
    $region12: #{svm_forward.1} parent=1 // pred_region
      %s28 = ssub.s32 16, 16
      %29 = vsyncadd [#allocation6], %s28
      %s31 = sshll.u32 [#allocation5], 4
      %s32 = int_to_ptr.vmem [resolvable:$true] %s31
      %34 = dma.hbm_to_vmem [thread:$0]  %s2, 16, %s32, [#allocation6]
    $region13: #{svm_forward.1} parent=1 // pred_fallthru
      _
    // Predicated region
    $region14: #{svm_forward.1} parent=1 // pred_check
      _
    $region15: #{svm_forward.1} parent=1 // pred_check_branch
      %36 = sbr.rel (0) target = $region17
    $region16: #{svm_forward.1} parent=1 // pred_region
      %37 = dma.done [#allocation3], 49152
    $region17: #{svm_forward.1} parent=1 // pred_fallthru
      _
    // Predicated region
    $region18: #{svm_forward.1} parent=1 // pred_check
      _
    $region19: #{svm_forward.1} parent=1 // pred_check_branch
      %39 = sbr.rel (0) target = $region21
    $region20: #{svm_forward.1} parent=1 // pred_region
      %40 = dma.done [#allocation6], 16
    $region21: #{svm_forward.1} parent=1 // pred_fallthru
      _
    %v41 = vld [vmem:[%s0] sm:$0xff]
    %v42 = vld [vmem:[%s0 + $0x8] sm:$0xff]
    %v43 = vld [vmem:[%s0 + $0x10] sm:$0xff]
    %v44 = vld [vmem:[%s0 + $0x18] sm:$0xff]
    %v45 = vld [vmem:[%s0 + $0x20] sm:$0xff]
    %v46 = vld [vmem:[%s0 + $0x28] sm:$0xff]
    %v47 = vld [vmem:[#allocation2] sm:$0xff]
    %v48 = vld [vmem:[#allocation2 + $0x8] sm:$0xff]
    %v49 = vld [vmem:[#allocation2 + $0x10] sm:$0xff]
    %v50 = vld [vmem:[#allocation2 + $0x18] sm:$0xff]
    %v51 = vld [vmem:[#allocation2 + $0x20] sm:$0xff]
    %v52 = vld [vmem:[#allocation2 + $0x28] sm:$0xff]
    %v53 = vld [vmem:[#allocation2 + $0x30] sm:$0xff]
    %v54 = vld [vmem:[#allocation2 + $0x38] sm:$0xff]
    %v55 = vld [vmem:[#allocation2 + $0x40] sm:$0xff]
    %v56 = vld [vmem:[#allocation2 + $0x48] sm:$0xff]
    %v57 = vld [vmem:[#allocation2 + $0x50] sm:$0xff]
    %v58 = vld [vmem:[#allocation2 + $0x58] sm:$0xff]
    %v59 = vld [vmem:[#allocation2 + $0x60] sm:$0xff]
    %v60 = vld [vmem:[#allocation2 + $0x68] sm:$0xff]
    %v61 = vld [vmem:[#allocation2 + $0x70] sm:$0xff]
    %v62 = vld [vmem:[#allocation2 + $0x78] sm:$0xff]
    %v63 = vld [vmem:[#allocation2 + $0x80] sm:$0xff]
    %v64 = vld [vmem:[#allocation2 + $0x88] sm:$0xff]
    %v65 = vld [vmem:[#allocation2 + $0x90] sm:$0xff]
    %v66 = vld [vmem:[#allocation2 + $0x98] sm:$0xff]
    %v67 = vld [vmem:[#allocation2 + $0xa0] sm:$0xff]
    %v68 = vld [vmem:[#allocation2 + $0xa8] sm:$0xff]
    %v69 = vld [vmem:[#allocation2 + $0xb0] sm:$0xff]
    %v70 = vld [vmem:[#allocation2 + $0xb8] sm:$0xff]
    %v71 = vld [vmem:[#allocation2 + $0xc0] sm:$0xff]
    %v72 = vld [vmem:[#allocation2 + $0xc8] sm:$0xff]
    %v73 = vld [vmem:[#allocation2 + $0xd0] sm:$0xff]
    %v74 = vld [vmem:[#allocation2 + $0xd8] sm:$0xff]
    %v75 = vld [vmem:[#allocation2 + $0xe0] sm:$0xff]
    %v76 = vld [vmem:[#allocation2 + $0xe8] sm:$0xff]
    %v77 = vld [vmem:[#allocation2 + $0xf0] sm:$0xff]
    %v78 = vld [vmem:[#allocation2 + $0xf8] sm:$0xff]
    %v79 = vld [vmem:[#allocation2 + $0x100] sm:$0xff]
    %v80 = vld [vmem:[#allocation2 + $0x108] sm:$0xff]
    %v81 = vld [vmem:[#allocation2 + $0x110] sm:$0xff]
    %v82 = vld [vmem:[#allocation2 + $0x118] sm:$0xff]
    %v83 = vld [vmem:[#allocation2 + $0x120] sm:$0xff]
    %v84 = vld [vmem:[#allocation2 + $0x128] sm:$0xff]
    %v85 = vld [vmem:[#allocation2 + $0x130] sm:$0xff]
    %v86 = vld [vmem:[#allocation2 + $0x138] sm:$0xff]
    %v87 = vld [vmem:[#allocation2 + $0x140] sm:$0xff]
    %v88 = vld [vmem:[#allocation2 + $0x148] sm:$0xff]
    %v89 = vld [vmem:[#allocation2 + $0x150] sm:$0xff]
    %v90 = vld [vmem:[#allocation2 + $0x158] sm:$0xff]
    %v91 = vld [vmem:[#allocation2 + $0x160] sm:$0xff]
    %v92 = vld [vmem:[#allocation2 + $0x168] sm:$0xff]
    %v93 = vld [vmem:[#allocation2 + $0x170] sm:$0xff]
    %v94 = vld [vmem:[#allocation2 + $0x178] sm:$0xff]
    %v95 = vld [vmem:[#allocation2 + $0x180] sm:$0xff]
    %v96 = vld [vmem:[#allocation2 + $0x188] sm:$0xff]
    %v97 = vld [vmem:[#allocation2 + $0x190] sm:$0xff]
    %v98 = vld [vmem:[#allocation2 + $0x198] sm:$0xff]
    %v99 = vld [vmem:[#allocation2 + $0x1a0] sm:$0xff]
    %v100 = vld [vmem:[#allocation2 + $0x1a8] sm:$0xff]
    %v101 = vld [vmem:[#allocation2 + $0x1b0] sm:$0xff]
    %v102 = vld [vmem:[#allocation2 + $0x1b8] sm:$0xff]
    %v103 = vld [vmem:[#allocation2 + $0x1c0] sm:$0xff]
    %v104 = vld [vmem:[#allocation2 + $0x1c8] sm:$0xff]
    %v105 = vld [vmem:[#allocation2 + $0x1d0] sm:$0xff]
    %v106 = vld [vmem:[#allocation2 + $0x1d8] sm:$0xff]
    %v107 = vld [vmem:[#allocation2 + $0x1e0] sm:$0xff]
    %v108 = vld [vmem:[#allocation2 + $0x1e8] sm:$0xff]
    %v109 = vld [vmem:[#allocation2 + $0x1f0] sm:$0xff]
    %v110 = vld [vmem:[#allocation2 + $0x1f8] sm:$0xff]
    %v111 = vld [vmem:[#allocation2 + $0x200] sm:$0xff]
    %v112 = vld [vmem:[#allocation2 + $0x208] sm:$0xff]
    %v113 = vld [vmem:[#allocation2 + $0x210] sm:$0xff]
    %v114 = vld [vmem:[#allocation2 + $0x218] sm:$0xff]
    %v115 = vld [vmem:[#allocation2 + $0x220] sm:$0xff]
    %v116 = vld [vmem:[#allocation2 + $0x228] sm:$0xff]
    %v117 = vld [vmem:[#allocation2 + $0x230] sm:$0xff]
    %v118 = vld [vmem:[#allocation2 + $0x238] sm:$0xff]
    %v119 = vld [vmem:[#allocation2 + $0x240] sm:$0xff]
    %v120 = vld [vmem:[#allocation2 + $0x248] sm:$0xff]
    %v121 = vld [vmem:[#allocation2 + $0x250] sm:$0xff]
    %v122 = vld [vmem:[#allocation2 + $0x258] sm:$0xff]
    %v123 = vld [vmem:[#allocation2 + $0x260] sm:$0xff]
    %v124 = vld [vmem:[#allocation2 + $0x268] sm:$0xff]
    %v125 = vld [vmem:[#allocation2 + $0x270] sm:$0xff]
    %v126 = vld [vmem:[#allocation2 + $0x278] sm:$0xff]
    %v127 = vld [vmem:[#allocation2 + $0x280] sm:$0xff]
    %v128 = vld [vmem:[#allocation2 + $0x288] sm:$0xff]
    %v129 = vld [vmem:[#allocation2 + $0x290] sm:$0xff]
    %v130 = vld [vmem:[#allocation2 + $0x298] sm:$0xff]
    %v131 = vld [vmem:[#allocation2 + $0x2a0] sm:$0xff]
    %v132 = vld [vmem:[#allocation2 + $0x2a8] sm:$0xff]
    %v133 = vld [vmem:[#allocation2 + $0x2b0] sm:$0xff]
    %v134 = vld [vmem:[#allocation2 + $0x2b8] sm:$0xff]
    %v135 = vld [vmem:[#allocation2 + $0x2c0] sm:$0xff]
    %v136 = vld [vmem:[#allocation2 + $0x2c8] sm:$0xff]
    %v137 = vld [vmem:[#allocation2 + $0x2d0] sm:$0xff]
    %v138 = vld [vmem:[#allocation2 + $0x2d8] sm:$0xff]
    %v139 = vld [vmem:[#allocation2 + $0x2e0] sm:$0xff]
    %v140 = vld [vmem:[#allocation2 + $0x2e8] sm:$0xff]
    %v141 = vld [vmem:[#allocation2 + $0x2f0] sm:$0xff]
    %v142 = vld [vmem:[#allocation2 + $0x2f8] sm:$0xff]
    %v143 = vld [vmem:[#allocation2 + $0x300] sm:$0xff]
    %v144 = vld [vmem:[#allocation2 + $0x308] sm:$0xff]
    %v145 = vld [vmem:[#allocation2 + $0x310] sm:$0xff]
    %v146 = vld [vmem:[#allocation2 + $0x318] sm:$0xff]
    %v147 = vld [vmem:[#allocation2 + $0x320] sm:$0xff]
    %v148 = vld [vmem:[#allocation2 + $0x328] sm:$0xff]
    %v149 = vld [vmem:[#allocation2 + $0x330] sm:$0xff]
    %v150 = vld [vmem:[#allocation2 + $0x338] sm:$0xff]
    %v151 = vld [vmem:[#allocation2 + $0x340] sm:$0xff]
    %v152 = vld [vmem:[#allocation2 + $0x348] sm:$0xff]
    %v153 = vld [vmem:[#allocation2 + $0x350] sm:$0xff]
    %v154 = vld [vmem:[#allocation2 + $0x358] sm:$0xff]
    %v155 = vld [vmem:[#allocation2 + $0x360] sm:$0xff]
    %v156 = vld [vmem:[#allocation2 + $0x368] sm:$0xff]
    %v157 = vld [vmem:[#allocation2 + $0x370] sm:$0xff]
    %v158 = vld [vmem:[#allocation2 + $0x378] sm:$0xff]
    %v159 = vld [vmem:[#allocation2 + $0x380] sm:$0xff]
    %v160 = vld [vmem:[#allocation2 + $0x388] sm:$0xff]
    %v161 = vld [vmem:[#allocation2 + $0x390] sm:$0xff]
    %v162 = vld [vmem:[#allocation2 + $0x398] sm:$0xff]
    %v163 = vld [vmem:[#allocation2 + $0x3a0] sm:$0xff]
    %v164 = vld [vmem:[#allocation2 + $0x3a8] sm:$0xff]
    %v165 = vld [vmem:[#allocation2 + $0x3b0] sm:$0xff]
    %v166 = vld [vmem:[#allocation2 + $0x3b8] sm:$0xff]
    %v167 = vld [vmem:[#allocation2 + $0x3c0] sm:$0xff]
    %v168 = vld [vmem:[#allocation2 + $0x3c8] sm:$0xff]
    %v169 = vld [vmem:[#allocation2 + $0x3d0] sm:$0xff]
    %v170 = vld [vmem:[#allocation2 + $0x3d8] sm:$0xff]
    %v171 = vld [vmem:[#allocation2 + $0x3e0] sm:$0xff]
    %v172 = vld [vmem:[#allocation2 + $0x3e8] sm:$0xff]
    %v173 = vld [vmem:[#allocation2 + $0x3f0] sm:$0xff]
    %v174 = vld [vmem:[#allocation2 + $0x3f8] sm:$0xff]
    %v175 = vld [vmem:[#allocation2 + $0x400] sm:$0xff]
    %v176 = vld [vmem:[#allocation2 + $0x408] sm:$0xff]
    %v177 = vld [vmem:[#allocation2 + $0x410] sm:$0xff]
    %v178 = vld [vmem:[#allocation2 + $0x418] sm:$0xff]
    %v179 = vld [vmem:[#allocation2 + $0x420] sm:$0xff]
    %v180 = vld [vmem:[#allocation2 + $0x428] sm:$0xff]
    %v181 = vld [vmem:[#allocation2 + $0x430] sm:$0xff]
    %v182 = vld [vmem:[#allocation2 + $0x438] sm:$0xff]
    %v183 = vld [vmem:[#allocation2 + $0x440] sm:$0xff]
    %v184 = vld [vmem:[#allocation2 + $0x448] sm:$0xff]
    %v185 = vld [vmem:[#allocation2 + $0x450] sm:$0xff]
    %v186 = vld [vmem:[#allocation2 + $0x458] sm:$0xff]
    %v187 = vld [vmem:[#allocation2 + $0x460] sm:$0xff]
    %v188 = vld [vmem:[#allocation2 + $0x468] sm:$0xff]
    %v189 = vld [vmem:[#allocation2 + $0x470] sm:$0xff]
    %v190 = vld [vmem:[#allocation2 + $0x478] sm:$0xff]
    %v191 = vld [vmem:[#allocation2 + $0x480] sm:$0xff]
    %v192 = vld [vmem:[#allocation2 + $0x488] sm:$0xff]
    %v193 = vld [vmem:[#allocation2 + $0x490] sm:$0xff]
    %v194 = vld [vmem:[#allocation2 + $0x498] sm:$0xff]
    %v195 = vld [vmem:[#allocation2 + $0x4a0] sm:$0xff]
    %v196 = vld [vmem:[#allocation2 + $0x4a8] sm:$0xff]
    %v197 = vld [vmem:[#allocation2 + $0x4b0] sm:$0xff]
    %v198 = vld [vmem:[#allocation2 + $0x4b8] sm:$0xff]
    %v199 = vld [vmem:[#allocation2 + $0x4c0] sm:$0xff]
    %v200 = vld [vmem:[#allocation2 + $0x4c8] sm:$0xff]
    %v201 = vld [vmem:[#allocation2 + $0x4d0] sm:$0xff]
    %v202 = vld [vmem:[#allocation2 + $0x4d8] sm:$0xff]
    %v203 = vld [vmem:[#allocation2 + $0x4e0] sm:$0xff]
    %v204 = vld [vmem:[#allocation2 + $0x4e8] sm:$0xff]
    %v205 = vld [vmem:[#allocation2 + $0x4f0] sm:$0xff]
    %v206 = vld [vmem:[#allocation2 + $0x4f8] sm:$0xff]
    %v207 = vld [vmem:[#allocation2 + $0x500] sm:$0xff]
    %v208 = vld [vmem:[#allocation2 + $0x508] sm:$0xff]
    %v209 = vld [vmem:[#allocation2 + $0x510] sm:$0xff]
    %v210 = vld [vmem:[#allocation2 + $0x518] sm:$0xff]
    %v211 = vld [vmem:[#allocation2 + $0x520] sm:$0xff]
    %v212 = vld [vmem:[#allocation2 + $0x528] sm:$0xff]
    %v213 = vld [vmem:[#allocation2 + $0x530] sm:$0xff]
    %v214 = vld [vmem:[#allocation2 + $0x538] sm:$0xff]
    %v215 = vld [vmem:[#allocation2 + $0x540] sm:$0xff]
    %v216 = vld [vmem:[#allocation2 + $0x548] sm:$0xff]
    %v217 = vld [vmem:[#allocation2 + $0x550] sm:$0xff]
    %v218 = vld [vmem:[#allocation2 + $0x558] sm:$0xff]
    %v219 = vld [vmem:[#allocation2 + $0x560] sm:$0xff]
    %v220 = vld [vmem:[#allocation2 + $0x568] sm:$0xff]
    %v221 = vld [vmem:[#allocation2 + $0x570] sm:$0xff]
    %v222 = vld [vmem:[#allocation2 + $0x578] sm:$0xff]
    %v223 = vld [vmem:[#allocation2 + $0x580] sm:$0xff]
    %v224 = vld [vmem:[#allocation2 + $0x588] sm:$0xff]
    %v225 = vld [vmem:[#allocation2 + $0x590] sm:$0xff]
    %v226 = vld [vmem:[#allocation2 + $0x598] sm:$0xff]
    %v227 = vld [vmem:[#allocation2 + $0x5a0] sm:$0xff]
    %v228 = vld [vmem:[#allocation2 + $0x5a8] sm:$0xff]
    %v229 = vld [vmem:[#allocation2 + $0x5b0] sm:$0xff]
    %v230 = vld [vmem:[#allocation2 + $0x5b8] sm:$0xff]
    %v231 = vld [vmem:[#allocation2 + $0x5c0] sm:$0xff]
    %v232 = vld [vmem:[#allocation2 + $0x5c8] sm:$0xff]
    %v233 = vld [vmem:[#allocation2 + $0x5d0] sm:$0xff]
    %v234 = vld [vmem:[#allocation2 + $0x5d8] sm:$0xff]
    %v235 = vld [vmem:[#allocation2 + $0x5e0] sm:$0xff]
    %v236 = vld [vmem:[#allocation2 + $0x5e8] sm:$0xff]
    %v237 = vld [vmem:[#allocation2 + $0x5f0] sm:$0xff]
    %v238 = vld [vmem:[#allocation2 + $0x5f8] sm:$0xff]
    %v239 = vld [vmem:[#allocation2 + $0x600] sm:$0xff]
    %v240 = vld [vmem:[#allocation2 + $0x608] sm:$0xff]
    %v241 = vld [vmem:[#allocation2 + $0x610] sm:$0xff]
    %v242 = vld [vmem:[#allocation2 + $0x618] sm:$0xff]
    %v243 = vld [vmem:[#allocation2 + $0x620] sm:$0xff]
    %v244 = vld [vmem:[#allocation2 + $0x628] sm:$0xff]
    %v245 = vld [vmem:[#allocation2 + $0x630] sm:$0xff]
    %v246 = vld [vmem:[#allocation2 + $0x638] sm:$0xff]
    %v247 = vld [vmem:[#allocation2 + $0x640] sm:$0xff]
    %v248 = vld [vmem:[#allocation2 + $0x648] sm:$0xff]
    %v249 = vld [vmem:[#allocation2 + $0x650] sm:$0xff]
    %v250 = vld [vmem:[#allocation2 + $0x658] sm:$0xff]
    %v251 = vld [vmem:[#allocation2 + $0x660] sm:$0xff]
    %v252 = vld [vmem:[#allocation2 + $0x668] sm:$0xff]
    %v253 = vld [vmem:[#allocation2 + $0x670] sm:$0xff]
    %v254 = vld [vmem:[#allocation2 + $0x678] sm:$0xff]
    %v255 = vld [vmem:[#allocation2 + $0x680] sm:$0xff]
    %v256 = vld [vmem:[#allocation2 + $0x688] sm:$0xff]
    %v257 = vld [vmem:[#allocation2 + $0x690] sm:$0xff]
    %v258 = vld [vmem:[#allocation2 + $0x698] sm:$0xff]
    %v259 = vld [vmem:[#allocation2 + $0x6a0] sm:$0xff]
    %v260 = vld [vmem:[#allocation2 + $0x6a8] sm:$0xff]
    %v261 = vld [vmem:[#allocation2 + $0x6b0] sm:$0xff]
    %v262 = vld [vmem:[#allocation2 + $0x6b8] sm:$0xff]
    %v263 = vld [vmem:[#allocation2 + $0x6c0] sm:$0xff]
    %v264 = vld [vmem:[#allocation2 + $0x6c8] sm:$0xff]
    %v265 = vld [vmem:[#allocation2 + $0x6d0] sm:$0xff]
    %v266 = vld [vmem:[#allocation2 + $0x6d8] sm:$0xff]
    %v267 = vld [vmem:[#allocation2 + $0x6e0] sm:$0xff]
    %v268 = vld [vmem:[#allocation2 + $0x6e8] sm:$0xff]
    %v269 = vld [vmem:[#allocation2 + $0x6f0] sm:$0xff]
    %v270 = vld [vmem:[#allocation2 + $0x6f8] sm:$0xff]
    %v271 = vld [vmem:[#allocation2 + $0x700] sm:$0xff]
    %v272 = vld [vmem:[#allocation2 + $0x708] sm:$0xff]
    %v273 = vld [vmem:[#allocation2 + $0x710] sm:$0xff]
    %v274 = vld [vmem:[#allocation2 + $0x718] sm:$0xff]
    %v275 = vld [vmem:[#allocation2 + $0x720] sm:$0xff]
    %v276 = vld [vmem:[#allocation2 + $0x728] sm:$0xff]
    %v277 = vld [vmem:[#allocation2 + $0x730] sm:$0xff]
    %v278 = vld [vmem:[#allocation2 + $0x738] sm:$0xff]
    %v279 = vld [vmem:[#allocation2 + $0x740] sm:$0xff]
    %v280 = vld [vmem:[#allocation2 + $0x748] sm:$0xff]
    %v281 = vld [vmem:[#allocation2 + $0x750] sm:$0xff]
    %v282 = vld [vmem:[#allocation2 + $0x758] sm:$0xff]
    %v283 = vld [vmem:[#allocation2 + $0x760] sm:$0xff]
    %v284 = vld [vmem:[#allocation2 + $0x768] sm:$0xff]
    %v285 = vld [vmem:[#allocation2 + $0x770] sm:$0xff]
    %v286 = vld [vmem:[#allocation2 + $0x778] sm:$0xff]
    %v287 = vld [vmem:[#allocation2 + $0x780] sm:$0xff]
    %v288 = vld [vmem:[#allocation2 + $0x788] sm:$0xff]
    %v289 = vld [vmem:[#allocation2 + $0x790] sm:$0xff]
    %v290 = vld [vmem:[#allocation2 + $0x798] sm:$0xff]
    %v291 = vld [vmem:[#allocation2 + $0x7a0] sm:$0xff]
    %v292 = vld [vmem:[#allocation2 + $0x7a8] sm:$0xff]
    %v293 = vld [vmem:[#allocation2 + $0x7b0] sm:$0xff]
    %v294 = vld [vmem:[#allocation2 + $0x7b8] sm:$0xff]
    %v295 = vld [vmem:[#allocation2 + $0x7c0] sm:$0xff]
    %v296 = vld [vmem:[#allocation2 + $0x7c8] sm:$0xff]
    %v297 = vld [vmem:[#allocation2 + $0x7d0] sm:$0xff]
    %v298 = vld [vmem:[#allocation2 + $0x7d8] sm:$0xff]
    %v299 = vld [vmem:[#allocation2 + $0x7e0] sm:$0xff]
    %v300 = vld [vmem:[#allocation2 + $0x7e8] sm:$0xff]
    %v301 = vld [vmem:[#allocation2 + $0x7f0] sm:$0xff]
    %v302 = vld [vmem:[#allocation2 + $0x7f8] sm:$0xff]
    %v303 = vld [vmem:[#allocation2 + $0x800] sm:$0xff]
    %v304 = vld [vmem:[#allocation2 + $0x808] sm:$0xff]
    %v305 = vld [vmem:[#allocation2 + $0x810] sm:$0xff]
    %v306 = vld [vmem:[#allocation2 + $0x818] sm:$0xff]
    %v307 = vld [vmem:[#allocation2 + $0x820] sm:$0xff]
    %v308 = vld [vmem:[#allocation2 + $0x828] sm:$0xff]
    %v309 = vld [vmem:[#allocation2 + $0x830] sm:$0xff]
    %v310 = vld [vmem:[#allocation2 + $0x838] sm:$0xff]
    %v311 = vld [vmem:[#allocation2 + $0x840] sm:$0xff]
    %v312 = vld [vmem:[#allocation2 + $0x848] sm:$0xff]
    %v313 = vld [vmem:[#allocation2 + $0x850] sm:$0xff]
    %v314 = vld [vmem:[#allocation2 + $0x858] sm:$0xff]
    %v315 = vld [vmem:[#allocation2 + $0x860] sm:$0xff]
    %v316 = vld [vmem:[#allocation2 + $0x868] sm:$0xff]
    %v317 = vld [vmem:[#allocation2 + $0x870] sm:$0xff]
    %v318 = vld [vmem:[#allocation2 + $0x878] sm:$0xff]
    %v319 = vld [vmem:[#allocation2 + $0x880] sm:$0xff]
    %v320 = vld [vmem:[#allocation2 + $0x888] sm:$0xff]
    %v321 = vld [vmem:[#allocation2 + $0x890] sm:$0xff]
    %v322 = vld [vmem:[#allocation2 + $0x898] sm:$0xff]
    %v323 = vld [vmem:[#allocation2 + $0x8a0] sm:$0xff]
    %v324 = vld [vmem:[#allocation2 + $0x8a8] sm:$0xff]
    %v325 = vld [vmem:[#allocation2 + $0x8b0] sm:$0xff]
    %v326 = vld [vmem:[#allocation2 + $0x8b8] sm:$0xff]
    %v327 = vld [vmem:[#allocation2 + $0x8c0] sm:$0xff]
    %v328 = vld [vmem:[#allocation2 + $0x8c8] sm:$0xff]
    %v329 = vld [vmem:[#allocation2 + $0x8d0] sm:$0xff]
    %v330 = vld [vmem:[#allocation2 + $0x8d8] sm:$0xff]
    %v331 = vld [vmem:[#allocation2 + $0x8e0] sm:$0xff]
    %v332 = vld [vmem:[#allocation2 + $0x8e8] sm:$0xff]
    %v333 = vld [vmem:[#allocation2 + $0x8f0] sm:$0xff]
    %v334 = vld [vmem:[#allocation2 + $0x8f8] sm:$0xff]
    %v335 = vld [vmem:[#allocation2 + $0x900] sm:$0xff]
    %v336 = vld [vmem:[#allocation2 + $0x908] sm:$0xff]
    %v337 = vld [vmem:[#allocation2 + $0x910] sm:$0xff]
    %v338 = vld [vmem:[#allocation2 + $0x918] sm:$0xff]
    %v339 = vld [vmem:[#allocation2 + $0x920] sm:$0xff]
    %v340 = vld [vmem:[#allocation2 + $0x928] sm:$0xff]
    %v341 = vld [vmem:[#allocation2 + $0x930] sm:$0xff]
    %v342 = vld [vmem:[#allocation2 + $0x938] sm:$0xff]
    %v343 = vld [vmem:[#allocation2 + $0x940] sm:$0xff]
    %v344 = vld [vmem:[#allocation2 + $0x948] sm:$0xff]
    %v345 = vld [vmem:[#allocation2 + $0x950] sm:$0xff]
    %v346 = vld [vmem:[#allocation2 + $0x958] sm:$0xff]
    %v347 = vld [vmem:[#allocation2 + $0x960] sm:$0xff]
    %v348 = vld [vmem:[#allocation2 + $0x968] sm:$0xff]
    %v349 = vld [vmem:[#allocation2 + $0x970] sm:$0xff]
    %v350 = vld [vmem:[#allocation2 + $0x978] sm:$0xff]
    %v351 = vld [vmem:[#allocation2 + $0x980] sm:$0xff]
    %v352 = vld [vmem:[#allocation2 + $0x988] sm:$0xff]
    %v353 = vld [vmem:[#allocation2 + $0x990] sm:$0xff]
    %v354 = vld [vmem:[#allocation2 + $0x998] sm:$0xff]
    %v355 = vld [vmem:[#allocation2 + $0x9a0] sm:$0xff]
    %v356 = vld [vmem:[#allocation2 + $0x9a8] sm:$0xff]
    %v357 = vld [vmem:[#allocation2 + $0x9b0] sm:$0xff]
    %v358 = vld [vmem:[#allocation2 + $0x9b8] sm:$0xff]
    %v359 = vld [vmem:[#allocation2 + $0x9c0] sm:$0xff]
    %v360 = vld [vmem:[#allocation2 + $0x9c8] sm:$0xff]
    %v361 = vld [vmem:[#allocation2 + $0x9d0] sm:$0xff]
    %v362 = vld [vmem:[#allocation2 + $0x9d8] sm:$0xff]
    %v363 = vld [vmem:[#allocation2 + $0x9e0] sm:$0xff]
    %v364 = vld [vmem:[#allocation2 + $0x9e8] sm:$0xff]
    %v365 = vld [vmem:[#allocation2 + $0x9f0] sm:$0xff]
    %v366 = vld [vmem:[#allocation2 + $0x9f8] sm:$0xff]
    %v367 = vld [vmem:[#allocation2 + $0xa00] sm:$0xff]
    %v368 = vld [vmem:[#allocation2 + $0xa08] sm:$0xff]
    %v369 = vld [vmem:[#allocation2 + $0xa10] sm:$0xff]
    %v370 = vld [vmem:[#allocation2 + $0xa18] sm:$0xff]
    %v371 = vld [vmem:[#allocation2 + $0xa20] sm:$0xff]
    %v372 = vld [vmem:[#allocation2 + $0xa28] sm:$0xff]
    %v373 = vld [vmem:[#allocation2 + $0xa30] sm:$0xff]
    %v374 = vld [vmem:[#allocation2 + $0xa38] sm:$0xff]
    %v375 = vld [vmem:[#allocation2 + $0xa40] sm:$0xff]
    %v376 = vld [vmem:[#allocation2 + $0xa48] sm:$0xff]
    %v377 = vld [vmem:[#allocation2 + $0xa50] sm:$0xff]
    %v378 = vld [vmem:[#allocation2 + $0xa58] sm:$0xff]
    %v379 = vld [vmem:[#allocation2 + $0xa60] sm:$0xff]
    %v380 = vld [vmem:[#allocation2 + $0xa68] sm:$0xff]
    %v381 = vld [vmem:[#allocation2 + $0xa70] sm:$0xff]
    %v382 = vld [vmem:[#allocation2 + $0xa78] sm:$0xff]
    %v383 = vld [vmem:[#allocation2 + $0xa80] sm:$0xff]
    %v384 = vld [vmem:[#allocation2 + $0xa88] sm:$0xff]
    %v385 = vld [vmem:[#allocation2 + $0xa90] sm:$0xff]
    %v386 = vld [vmem:[#allocation2 + $0xa98] sm:$0xff]
    %v387 = vld [vmem:[#allocation2 + $0xaa0] sm:$0xff]
    %v388 = vld [vmem:[#allocation2 + $0xaa8] sm:$0xff]
    %v389 = vld [vmem:[#allocation2 + $0xab0] sm:$0xff]
    %v390 = vld [vmem:[#allocation2 + $0xab8] sm:$0xff]
    %v391 = vld [vmem:[#allocation2 + $0xac0] sm:$0xff]
    %v392 = vld [vmem:[#allocation2 + $0xac8] sm:$0xff]
    %v393 = vld [vmem:[#allocation2 + $0xad0] sm:$0xff]
    %v394 = vld [vmem:[#allocation2 + $0xad8] sm:$0xff]
    %v395 = vld [vmem:[#allocation2 + $0xae0] sm:$0xff]
    %v396 = vld [vmem:[#allocation2 + $0xae8] sm:$0xff]
    %v397 = vld [vmem:[#allocation2 + $0xaf0] sm:$0xff]
    %v398 = vld [vmem:[#allocation2 + $0xaf8] sm:$0xff]
    %v399 = vld [vmem:[#allocation2 + $0xb00] sm:$0xff]
    %v400 = vld [vmem:[#allocation2 + $0xb08] sm:$0xff]
    %v401 = vld [vmem:[#allocation2 + $0xb10] sm:$0xff]
    %v402 = vld [vmem:[#allocation2 + $0xb18] sm:$0xff]
    %v403 = vld [vmem:[#allocation2 + $0xb20] sm:$0xff]
    %v404 = vld [vmem:[#allocation2 + $0xb28] sm:$0xff]
    %v405 = vld [vmem:[#allocation2 + $0xb30] sm:$0xff]
    %v406 = vld [vmem:[#allocation2 + $0xb38] sm:$0xff]
    %v407 = vld [vmem:[#allocation2 + $0xb40] sm:$0xff]
    %v408 = vld [vmem:[#allocation2 + $0xb48] sm:$0xff]
    %v409 = vld [vmem:[#allocation2 + $0xb50] sm:$0xff]
    %v410 = vld [vmem:[#allocation2 + $0xb58] sm:$0xff]
    %v411 = vld [vmem:[#allocation2 + $0xb60] sm:$0xff]
    %v412 = vld [vmem:[#allocation2 + $0xb68] sm:$0xff]
    %v413 = vld [vmem:[#allocation2 + $0xb70] sm:$0xff]
    %v414 = vld [vmem:[#allocation2 + $0xb78] sm:$0xff]
    %v415 = vld [vmem:[#allocation2 + $0xb80] sm:$0xff]
    %v416 = vld [vmem:[#allocation2 + $0xb88] sm:$0xff]
    %v417 = vld [vmem:[#allocation2 + $0xb90] sm:$0xff]
    %v418 = vld [vmem:[#allocation2 + $0xb98] sm:$0xff]
    %v419 = vld [vmem:[#allocation2 + $0xba0] sm:$0xff]
    %v420 = vld [vmem:[#allocation2 + $0xba8] sm:$0xff]
    %v421 = vld [vmem:[#allocation2 + $0xbb0] sm:$0xff]
    %v422 = vld [vmem:[#allocation2 + $0xbb8] sm:$0xff]
    %v423 = vld [vmem:[#allocation2 + $0xbc0] sm:$0xff]
    %v424 = vld [vmem:[#allocation2 + $0xbc8] sm:$0xff]
    %v425 = vld [vmem:[#allocation2 + $0xbd0] sm:$0xff]
    %v426 = vld [vmem:[#allocation2 + $0xbd8] sm:$0xff]
    %v427 = vld [vmem:[#allocation2 + $0xbe0] sm:$0xff]
    %v428 = vld [vmem:[#allocation2 + $0xbe8] sm:$0xff]
    %v429 = vld [vmem:[#allocation2 + $0xbf0] sm:$0xff]
    %v430 = vld [vmem:[#allocation2 + $0xbf8] sm:$0xff]
    %v437 = vcombine.high %v41, %v41
    %v439 = vunpack.c.l.s4 1983009808
    %v440 = vunpack.c.0.s8 %v439
    %v441 = vlaneseq
    %v442 = vshrl.u32 %v441, 7
    %v443 = vsub.s32 %v440, %v442
    %v444 = vrot.slane %v41, %v443
    %v446 = vunpack.c.l.s4 1983009808
    %v447 = vunpack.c.0.s8 %v446
    %v448 = vlaneseq
    %v449 = vshrl.u32 %v448, 7
    %v450 = vsub.s32 %v447, %v449
    %v451 = vrot.slane %v437, %v450
    %v452 = vcombine.high %v444, %v444
    %v453 = vcombine.high %v451, %v451
    %v454 = vcombine.high %v42, %v42
    %v456 = vunpack.c.l.s4 1983009808
    %v457 = vunpack.c.0.s8 %v456
    %v458 = vlaneseq
    %v459 = vshrl.u32 %v458, 7
    %v460 = vsub.s32 %v457, %v459
    %v461 = vrot.slane %v42, %v460
    %v463 = vunpack.c.l.s4 1983009808
    %v464 = vunpack.c.0.s8 %v463
    %v465 = vlaneseq
    %v466 = vshrl.u32 %v465, 7
    %v467 = vsub.s32 %v464, %v466
    %v468 = vrot.slane %v454, %v467
    %v469 = vcombine.high %v461, %v461
    %v470 = vcombine.high %v468, %v468
    %v471 = vcombine.high %v43, %v43
    %v473 = vunpack.c.l.s4 1983009808
    %v474 = vunpack.c.0.s8 %v473
    %v475 = vlaneseq
    %v476 = vshrl.u32 %v475, 7
    %v477 = vsub.s32 %v474, %v476
    %v478 = vrot.slane %v43, %v477
    %v480 = vunpack.c.l.s4 1983009808
    %v481 = vunpack.c.0.s8 %v480
    %v482 = vlaneseq
    %v483 = vshrl.u32 %v482, 7
    %v484 = vsub.s32 %v481, %v483
    %v485 = vrot.slane %v471, %v484
    %v486 = vcombine.high %v478, %v478
    %v487 = vcombine.high %v485, %v485
    %v488 = vcombine.high %v44, %v44
    %v490 = vunpack.c.l.s4 1983009808
    %v491 = vunpack.c.0.s8 %v490
    %v492 = vlaneseq
    %v493 = vshrl.u32 %v492, 7
    %v494 = vsub.s32 %v491, %v493
    %v495 = vrot.slane %v44, %v494
    %v497 = vunpack.c.l.s4 1983009808
    %v498 = vunpack.c.0.s8 %v497
    %v499 = vlaneseq
    %v500 = vshrl.u32 %v499, 7
    %v501 = vsub.s32 %v498, %v500
    %v502 = vrot.slane %v488, %v501
    %v503 = vcombine.high %v495, %v495
    %v504 = vcombine.high %v502, %v502
    %v505 = vcombine.high %v45, %v45
    %v507 = vunpack.c.l.s4 1983009808
    %v508 = vunpack.c.0.s8 %v507
    %v509 = vlaneseq
    %v510 = vshrl.u32 %v509, 7
    %v511 = vsub.s32 %v508, %v510
    %v512 = vrot.slane %v45, %v511
    %v514 = vunpack.c.l.s4 1983009808
    %v515 = vunpack.c.0.s8 %v514
    %v516 = vlaneseq
    %v517 = vshrl.u32 %v516, 7
    %v518 = vsub.s32 %v515, %v517
    %v519 = vrot.slane %v505, %v518
    %v520 = vcombine.high %v512, %v512
    %v521 = vcombine.high %v519, %v519
    %v522 = vcombine.high %v46, %v46
    %v524 = vunpack.c.l.s4 1983009808
    %v525 = vunpack.c.0.s8 %v524
    %v526 = vlaneseq
    %v527 = vshrl.u32 %v526, 7
    %v528 = vsub.s32 %v525, %v527
    %v529 = vrot.slane %v46, %v528
    %v531 = vunpack.c.l.s4 1983009808
    %v532 = vunpack.c.0.s8 %v531
    %v533 = vlaneseq
    %v534 = vshrl.u32 %v533, 7
    %v535 = vsub.s32 %v532, %v534
    %v536 = vrot.slane %v522, %v535
    %v537 = vcombine.high %v529, %v529
    %v538 = vcombine.high %v536, %v536
    %563 = vmatprep.subr.mxu0 0.0
    %564 = vmatpush1.msra.mxu0 %v47
    %565 = vmatprep.subr.mxu0 0.0
    %566 = vmatpush1.msra.mxu0 %v48
    %567 = vmatprep.subr.mxu0 0.0
    %568 = vmatpush1.msra.mxu0 %v49
    %569 = vmatprep.subr.mxu0 0.0
    %570 = vmatpush1.msra.mxu0 %v50
    %571 = vmatprep.subr.mxu0 0.0
    %572 = vmatpush1.msra.mxu0 %v51
    %573 = vmatprep.subr.mxu0 0.0
    %574 = vmatpush1.msra.mxu0 %v52
    %575 = vmatprep.subr.mxu0 0.0
    %576 = vmatpush1.msra.mxu0 %v53
    %577 = vmatprep.subr.mxu0 0.0
    %578 = vmatpush1.msra.mxu0 %v54
    %579 = vmatprep.subr.mxu0 0.0
    %580 = vmatpush1.msra.mxu0 %v55
    %581 = vmatprep.subr.mxu0 0.0
    %582 = vmatpush1.msra.mxu0 %v56
    %583 = vmatprep.subr.mxu0 0.0
    %584 = vmatpush1.msra.mxu0 %v57
    %585 = vmatprep.subr.mxu0 0.0
    %586 = vmatpush1.msra.mxu0 %v58
    %587 = vmatprep.subr.mxu0 0.0
    %588 = vmatpush1.msra.mxu0 %v59
    %589 = vmatprep.subr.mxu0 0.0
    %590 = vmatpush1.msra.mxu0 %v60
    %591 = vmatprep.subr.mxu0 0.0
    %592 = vmatpush1.msra.mxu0 %v61
    %593 = vmatprep.subr.mxu0 0.0
    %594 = vmatpush1.msra.mxu0 %v62
    %595 = vmatprep.subr.mxu0 0.0
    %596 = vmatpush1.msra.mxu0 %v63
    %597 = vmatprep.subr.mxu0 0.0
    %598 = vmatpush1.msra.mxu0 %v64
    %599 = vmatprep.subr.mxu0 0.0
    %600 = vmatpush1.msra.mxu0 %v65
    %601 = vmatprep.subr.mxu0 0.0
    %602 = vmatpush1.msra.mxu0 %v66
    %603 = vmatprep.subr.mxu0 0.0
    %604 = vmatpush1.msra.mxu0 %v67
    %605 = vmatprep.subr.mxu0 0.0
    %606 = vmatpush1.msra.mxu0 %v68
    %607 = vmatprep.subr.mxu0 0.0
    %608 = vmatpush1.msra.mxu0 %v69
    %609 = vmatprep.subr.mxu0 0.0
    %610 = vmatpush1.msra.mxu0 %v70
    %611 = vmatprep.subr.mxu0 0.0
    %612 = vmatpush1.msra.mxu0 %v71
    %613 = vmatprep.subr.mxu0 0.0
    %614 = vmatpush1.msra.mxu0 %v72
    %615 = vmatprep.subr.mxu0 0.0
    %616 = vmatpush1.msra.mxu0 %v73
    %617 = vmatprep.subr.mxu0 0.0
    %618 = vmatpush1.msra.mxu0 %v74
    %619 = vmatprep.subr.mxu0 0.0
    %620 = vmatpush1.msra.mxu0 %v75
    %621 = vmatprep.subr.mxu0 0.0
    %622 = vmatpush1.msra.mxu0 %v76
    %623 = vmatprep.subr.mxu0 0.0
    %624 = vmatpush1.msra.mxu0 %v77
    %625 = vmatprep.subr.mxu0 0.0
    %626 = vmatpush1.msra.mxu0 %v78
    %627 = vmatprep.mubr.f32.mxu0 %v452
    %628 = vmatmul.mubr.f32.gmra.mrb[0].mxu0 %v444
    %v629 = vpop.f32.mrb[0].mxu0
    %v630 = vadd.f32 0.0, %v629
    %v631 = vpop.f32.mrb[0].mxu0
    %632 = vdwg.mxu0
    %633 = vmatprep.subr.mxu0 0.0
    %634 = vmatpush1.msra.mxu0 %v79
    %635 = vmatprep.subr.mxu0 0.0
    %636 = vmatpush1.msra.mxu0 %v80
    %637 = vmatprep.subr.mxu0 0.0
    %638 = vmatpush1.msra.mxu0 %v81
    %639 = vmatprep.subr.mxu0 0.0
    %640 = vmatpush1.msra.mxu0 %v82
    %641 = vmatprep.subr.mxu0 0.0
    %642 = vmatpush1.msra.mxu0 %v83
    %643 = vmatprep.subr.mxu0 0.0
    %644 = vmatpush1.msra.mxu0 %v84
    %645 = vmatprep.subr.mxu0 0.0
    %646 = vmatpush1.msra.mxu0 %v85
    %647 = vmatprep.subr.mxu0 0.0
    %648 = vmatpush1.msra.mxu0 %v86
    %649 = vmatprep.subr.mxu0 0.0
    %650 = vmatpush1.msra.mxu0 %v87
    %651 = vmatprep.subr.mxu0 0.0
    %652 = vmatpush1.msra.mxu0 %v88
    %653 = vmatprep.subr.mxu0 0.0
    %654 = vmatpush1.msra.mxu0 %v89
    %655 = vmatprep.subr.mxu0 0.0
    %656 = vmatpush1.msra.mxu0 %v90
    %657 = vmatprep.subr.mxu0 0.0
    %658 = vmatpush1.msra.mxu0 %v91
    %659 = vmatprep.subr.mxu0 0.0
    %660 = vmatpush1.msra.mxu0 %v92
    %661 = vmatprep.subr.mxu0 0.0
    %662 = vmatpush1.msra.mxu0 %v93
    %663 = vmatprep.subr.mxu0 0.0
    %664 = vmatpush1.msra.mxu0 %v94
    %665 = vmatprep.subr.mxu0 0.0
    %666 = vmatpush1.msra.mxu0 %v95
    %667 = vmatprep.subr.mxu0 0.0
    %668 = vmatpush1.msra.mxu0 %v96
    %669 = vmatprep.subr.mxu0 0.0
    %670 = vmatpush1.msra.mxu0 %v97
    %671 = vmatprep.subr.mxu0 0.0
    %672 = vmatpush1.msra.mxu0 %v98
    %673 = vmatprep.subr.mxu0 0.0
    %674 = vmatpush1.msra.mxu0 %v99
    %675 = vmatprep.subr.mxu0 0.0
    %676 = vmatpush1.msra.mxu0 %v100
    %677 = vmatprep.subr.mxu0 0.0
    %678 = vmatpush1.msra.mxu0 %v101
    %679 = vmatprep.subr.mxu0 0.0
    %680 = vmatpush1.msra.mxu0 %v102
    %681 = vmatprep.subr.mxu0 0.0
    %682 = vmatpush1.msra.mxu0 %v103
    %683 = vmatprep.subr.mxu0 0.0
    %684 = vmatpush1.msra.mxu0 %v104
    %685 = vmatprep.subr.mxu0 0.0
    %686 = vmatpush1.msra.mxu0 %v105
    %687 = vmatprep.subr.mxu0 0.0
    %688 = vmatpush1.msra.mxu0 %v106
    %689 = vmatprep.subr.mxu0 0.0
    %690 = vmatpush1.msra.mxu0 %v107
    %691 = vmatprep.subr.mxu0 0.0
    %692 = vmatpush1.msra.mxu0 %v108
    %693 = vmatprep.subr.mxu0 0.0
    %694 = vmatpush1.msra.mxu0 %v109
    %695 = vmatprep.subr.mxu0 0.0
    %696 = vmatpush1.msra.mxu0 %v110
    %697 = vmatprep.mubr.f32.mxu0 %v453
    %698 = vmatmul.mubr.f32.gmra.mrb[0].mxu0 %v451
    %v699 = vpop.f32.mrb[0].mxu0
    %v700 = vadd.f32 %v630, %v699
    %v701 = vpop.f32.mrb[0].mxu0
    %702 = vdwg.mxu0
    %703 = vmatprep.subr.mxu0 0.0
    %704 = vmatpush1.msra.mxu0 %v111
    %705 = vmatprep.subr.mxu0 0.0
    %706 = vmatpush1.msra.mxu0 %v112
    %707 = vmatprep.subr.mxu0 0.0
    %708 = vmatpush1.msra.mxu0 %v113
    %709 = vmatprep.subr.mxu0 0.0
    %710 = vmatpush1.msra.mxu0 %v114
    %711 = vmatprep.subr.mxu0 0.0
    %712 = vmatpush1.msra.mxu0 %v115
    %713 = vmatprep.subr.mxu0 0.0
    %714 = vmatpush1.msra.mxu0 %v116
    %715 = vmatprep.subr.mxu0 0.0
    %716 = vmatpush1.msra.mxu0 %v117
    %717 = vmatprep.subr.mxu0 0.0
    %718 = vmatpush1.msra.mxu0 %v118
    %719 = vmatprep.subr.mxu0 0.0
    %720 = vmatpush1.msra.mxu0 %v119
    %721 = vmatprep.subr.mxu0 0.0
    %722 = vmatpush1.msra.mxu0 %v120
    %723 = vmatprep.subr.mxu0 0.0
    %724 = vmatpush1.msra.mxu0 %v121
    %725 = vmatprep.subr.mxu0 0.0
    %726 = vmatpush1.msra.mxu0 %v122
    %727 = vmatprep.subr.mxu0 0.0
    %728 = vmatpush1.msra.mxu0 %v123
    %729 = vmatprep.subr.mxu0 0.0
    %730 = vmatpush1.msra.mxu0 %v124
    %731 = vmatprep.subr.mxu0 0.0
    %732 = vmatpush1.msra.mxu0 %v125
    %733 = vmatprep.subr.mxu0 0.0
    %734 = vmatpush1.msra.mxu0 %v126
    %735 = vmatprep.subr.mxu0 0.0
    %736 = vmatpush1.msra.mxu0 %v127
    %737 = vmatprep.subr.mxu0 0.0
    %738 = vmatpush1.msra.mxu0 %v128
    %739 = vmatprep.subr.mxu0 0.0
    %740 = vmatpush1.msra.mxu0 %v129
    %741 = vmatprep.subr.mxu0 0.0
    %742 = vmatpush1.msra.mxu0 %v130
    %743 = vmatprep.subr.mxu0 0.0
    %744 = vmatpush1.msra.mxu0 %v131
    %745 = vmatprep.subr.mxu0 0.0
    %746 = vmatpush1.msra.mxu0 %v132
    %747 = vmatprep.subr.mxu0 0.0
    %748 = vmatpush1.msra.mxu0 %v133
    %749 = vmatprep.subr.mxu0 0.0
    %750 = vmatpush1.msra.mxu0 %v134
    %751 = vmatprep.subr.mxu0 0.0
    %752 = vmatpush1.msra.mxu0 %v135
    %753 = vmatprep.subr.mxu0 0.0
    %754 = vmatpush1.msra.mxu0 %v136
    %755 = vmatprep.subr.mxu0 0.0
    %756 = vmatpush1.msra.mxu0 %v137
    %757 = vmatprep.subr.mxu0 0.0
    %758 = vmatpush1.msra.mxu0 %v138
    %759 = vmatprep.subr.mxu0 0.0
    %760 = vmatpush1.msra.mxu0 %v139
    %761 = vmatprep.subr.mxu0 0.0
    %762 = vmatpush1.msra.mxu0 %v140
    %763 = vmatprep.subr.mxu0 0.0
    %764 = vmatpush1.msra.mxu0 %v141
    %765 = vmatprep.subr.mxu0 0.0
    %766 = vmatpush1.msra.mxu0 %v142
    %767 = vmatprep.mubr.f32.mxu0 %v469
    %768 = vmatmul.mubr.f32.gmra.mrb[0].mxu0 %v461
    %v769 = vpop.f32.mrb[0].mxu0
    %v770 = vadd.f32 %v700, %v769
    %v771 = vpop.f32.mrb[0].mxu0
    %772 = vdwg.mxu0
    %773 = vmatprep.subr.mxu0 0.0
    %774 = vmatpush1.msra.mxu0 %v143
    %775 = vmatprep.subr.mxu0 0.0
    %776 = vmatpush1.msra.mxu0 %v144
    %777 = vmatprep.subr.mxu0 0.0
    %778 = vmatpush1.msra.mxu0 %v145
    %779 = vmatprep.subr.mxu0 0.0
    %780 = vmatpush1.msra.mxu0 %v146
    %781 = vmatprep.subr.mxu0 0.0
    %782 = vmatpush1.msra.mxu0 %v147
    %783 = vmatprep.subr.mxu0 0.0
    %784 = vmatpush1.msra.mxu0 %v148
    %785 = vmatprep.subr.mxu0 0.0
    %786 = vmatpush1.msra.mxu0 %v149
    %787 = vmatprep.subr.mxu0 0.0
    %788 = vmatpush1.msra.mxu0 %v150
    %789 = vmatprep.subr.mxu0 0.0
    %790 = vmatpush1.msra.mxu0 %v151
    %791 = vmatprep.subr.mxu0 0.0
    %792 = vmatpush1.msra.mxu0 %v152
    %793 = vmatprep.subr.mxu0 0.0
    %794 = vmatpush1.msra.mxu0 %v153
    %795 = vmatprep.subr.mxu0 0.0
    %796 = vmatpush1.msra.mxu0 %v154
    %797 = vmatprep.subr.mxu0 0.0
    %798 = vmatpush1.msra.mxu0 %v155
    %799 = vmatprep.subr.mxu0 0.0
    %800 = vmatpush1.msra.mxu0 %v156
    %801 = vmatprep.subr.mxu0 0.0
    %802 = vmatpush1.msra.mxu0 %v157
    %803 = vmatprep.subr.mxu0 0.0
    %804 = vmatpush1.msra.mxu0 %v158
    %805 = vmatprep.subr.mxu0 0.0
    %806 = vmatpush1.msra.mxu0 %v159
    %807 = vmatprep.subr.mxu0 0.0
    %808 = vmatpush1.msra.mxu0 %v160
    %809 = vmatprep.subr.mxu0 0.0
    %810 = vmatpush1.msra.mxu0 %v161
    %811 = vmatprep.subr.mxu0 0.0
    %812 = vmatpush1.msra.mxu0 %v162
    %813 = vmatprep.subr.mxu0 0.0
    %814 = vmatpush1.msra.mxu0 %v163
    %815 = vmatprep.subr.mxu0 0.0
    %816 = vmatpush1.msra.mxu0 %v164
    %817 = vmatprep.subr.mxu0 0.0
    %818 = vmatpush1.msra.mxu0 %v165
    %819 = vmatprep.subr.mxu0 0.0
    %820 = vmatpush1.msra.mxu0 %v166
    %821 = vmatprep.subr.mxu0 0.0
    %822 = vmatpush1.msra.mxu0 %v167
    %823 = vmatprep.subr.mxu0 0.0
    %824 = vmatpush1.msra.mxu0 %v168
    %825 = vmatprep.subr.mxu0 0.0
    %826 = vmatpush1.msra.mxu0 %v169
    %827 = vmatprep.subr.mxu0 0.0
    %828 = vmatpush1.msra.mxu0 %v170
    %829 = vmatprep.subr.mxu0 0.0
    %830 = vmatpush1.msra.mxu0 %v171
    %831 = vmatprep.subr.mxu0 0.0
    %832 = vmatpush1.msra.mxu0 %v172
    %833 = vmatprep.subr.mxu0 0.0
    %834 = vmatpush1.msra.mxu0 %v173
    %835 = vmatprep.subr.mxu0 0.0
    %836 = vmatpush1.msra.mxu0 %v174
    %837 = vmatprep.mubr.f32.mxu0 %v470
    %838 = vmatmul.mubr.f32.gmra.mrb[0].mxu0 %v468
    %v839 = vpop.f32.mrb[0].mxu0
    %v840 = vadd.f32 %v770, %v839
    %v841 = vpop.f32.mrb[0].mxu0
    %842 = vdwg.mxu0
    %843 = vmatprep.subr.mxu0 0.0
    %844 = vmatpush1.msra.mxu0 %v175
    %845 = vmatprep.subr.mxu0 0.0
    %846 = vmatpush1.msra.mxu0 %v176
    %847 = vmatprep.subr.mxu0 0.0
    %848 = vmatpush1.msra.mxu0 %v177
    %849 = vmatprep.subr.mxu0 0.0
    %850 = vmatpush1.msra.mxu0 %v178
    %851 = vmatprep.subr.mxu0 0.0
    %852 = vmatpush1.msra.mxu0 %v179
    %853 = vmatprep.subr.mxu0 0.0
    %854 = vmatpush1.msra.mxu0 %v180
    %855 = vmatprep.subr.mxu0 0.0
    %856 = vmatpush1.msra.mxu0 %v181
    %857 = vmatprep.subr.mxu0 0.0
    %858 = vmatpush1.msra.mxu0 %v182
    %859 = vmatprep.subr.mxu0 0.0
    %860 = vmatpush1.msra.mxu0 %v183
    %861 = vmatprep.subr.mxu0 0.0
    %862 = vmatpush1.msra.mxu0 %v184
    %863 = vmatprep.subr.mxu0 0.0
    %864 = vmatpush1.msra.mxu0 %v185
    %865 = vmatprep.subr.mxu0 0.0
    %866 = vmatpush1.msra.mxu0 %v186
    %867 = vmatprep.subr.mxu0 0.0
    %868 = vmatpush1.msra.mxu0 %v187
    %869 = vmatprep.subr.mxu0 0.0
    %870 = vmatpush1.msra.mxu0 %v188
    %871 = vmatprep.subr.mxu0 0.0
    %872 = vmatpush1.msra.mxu0 %v189
    %873 = vmatprep.subr.mxu0 0.0
    %874 = vmatpush1.msra.mxu0 %v190
    %875 = vmatprep.subr.mxu0 0.0
    %876 = vmatpush1.msra.mxu0 %v191
    %877 = vmatprep.subr.mxu0 0.0
    %878 = vmatpush1.msra.mxu0 %v192
    %879 = vmatprep.subr.mxu0 0.0
    %880 = vmatpush1.msra.mxu0 %v193
    %881 = vmatprep.subr.mxu0 0.0
    %882 = vmatpush1.msra.mxu0 %v194
    %883 = vmatprep.subr.mxu0 0.0
    %884 = vmatpush1.msra.mxu0 %v195
    %885 = vmatprep.subr.mxu0 0.0
    %886 = vmatpush1.msra.mxu0 %v196
    %887 = vmatprep.subr.mxu0 0.0
    %888 = vmatpush1.msra.mxu0 %v197
    %889 = vmatprep.subr.mxu0 0.0
    %890 = vmatpush1.msra.mxu0 %v198
    %891 = vmatprep.subr.mxu0 0.0
    %892 = vmatpush1.msra.mxu0 %v199
    %893 = vmatprep.subr.mxu0 0.0
    %894 = vmatpush1.msra.mxu0 %v200
    %895 = vmatprep.subr.mxu0 0.0
    %896 = vmatpush1.msra.mxu0 %v201
    %897 = vmatprep.subr.mxu0 0.0
    %898 = vmatpush1.msra.mxu0 %v202
    %899 = vmatprep.subr.mxu0 0.0
    %900 = vmatpush1.msra.mxu0 %v203
    %901 = vmatprep.subr.mxu0 0.0
    %902 = vmatpush1.msra.mxu0 %v204
    %903 = vmatprep.subr.mxu0 0.0
    %904 = vmatpush1.msra.mxu0 %v205
    %905 = vmatprep.subr.mxu0 0.0
    %906 = vmatpush1.msra.mxu0 %v206
    %907 = vmatprep.mubr.f32.mxu0 %v486
    %908 = vmatmul.mubr.f32.gmra.mrb[0].mxu0 %v478
    %v909 = vpop.f32.mrb[0].mxu0
    %v910 = vadd.f32 %v840, %v909
    %v911 = vpop.f32.mrb[0].mxu0
    %912 = vdwg.mxu0
    %913 = vmatprep.subr.mxu0 0.0
    %914 = vmatpush1.msra.mxu0 %v207
    %915 = vmatprep.subr.mxu0 0.0
    %916 = vmatpush1.msra.mxu0 %v208
    %917 = vmatprep.subr.mxu0 0.0
    %918 = vmatpush1.msra.mxu0 %v209
    %919 = vmatprep.subr.mxu0 0.0
    %920 = vmatpush1.msra.mxu0 %v210
    %921 = vmatprep.subr.mxu0 0.0
    %922 = vmatpush1.msra.mxu0 %v211
    %923 = vmatprep.subr.mxu0 0.0
    %924 = vmatpush1.msra.mxu0 %v212
    %925 = vmatprep.subr.mxu0 0.0
    %926 = vmatpush1.msra.mxu0 %v213
    %927 = vmatprep.subr.mxu0 0.0
    %928 = vmatpush1.msra.mxu0 %v214
    %929 = vmatprep.subr.mxu0 0.0
    %930 = vmatpush1.msra.mxu0 %v215
    %931 = vmatprep.subr.mxu0 0.0
    %932 = vmatpush1.msra.mxu0 %v216
    %933 = vmatprep.subr.mxu0 0.0
    %934 = vmatpush1.msra.mxu0 %v217
    %935 = vmatprep.subr.mxu0 0.0
    %936 = vmatpush1.msra.mxu0 %v218
    %937 = vmatprep.subr.mxu0 0.0
    %938 = vmatpush1.msra.mxu0 %v219
    %939 = vmatprep.subr.mxu0 0.0
    %940 = vmatpush1.msra.mxu0 %v220
    %941 = vmatprep.subr.mxu0 0.0
    %942 = vmatpush1.msra.mxu0 %v221
    %943 = vmatprep.subr.mxu0 0.0
    %944 = vmatpush1.msra.mxu0 %v222
    %945 = vmatprep.subr.mxu0 0.0
    %946 = vmatpush1.msra.mxu0 %v223
    %947 = vmatprep.subr.mxu0 0.0
    %948 = vmatpush1.msra.mxu0 %v224
    %949 = vmatprep.subr.mxu0 0.0
    %950 = vmatpush1.msra.mxu0 %v225
    %951 = vmatprep.subr.mxu0 0.0
    %952 = vmatpush1.msra.mxu0 %v226
    %953 = vmatprep.subr.mxu0 0.0
    %954 = vmatpush1.msra.mxu0 %v227
    %955 = vmatprep.subr.mxu0 0.0
    %956 = vmatpush1.msra.mxu0 %v228
    %957 = vmatprep.subr.mxu0 0.0
    %958 = vmatpush1.msra.mxu0 %v229
    %959 = vmatprep.subr.mxu0 0.0
    %960 = vmatpush1.msra.mxu0 %v230
    %961 = vmatprep.subr.mxu0 0.0
    %962 = vmatpush1.msra.mxu0 %v231
    %963 = vmatprep.subr.mxu0 0.0
    %964 = vmatpush1.msra.mxu0 %v232
    %965 = vmatprep.subr.mxu0 0.0
    %966 = vmatpush1.msra.mxu0 %v233
    %967 = vmatprep.subr.mxu0 0.0
    %968 = vmatpush1.msra.mxu0 %v234
    %969 = vmatprep.subr.mxu0 0.0
    %970 = vmatpush1.msra.mxu0 %v235
    %971 = vmatprep.subr.mxu0 0.0
    %972 = vmatpush1.msra.mxu0 %v236
    %973 = vmatprep.subr.mxu0 0.0
    %974 = vmatpush1.msra.mxu0 %v237
    %975 = vmatprep.subr.mxu0 0.0
    %976 = vmatpush1.msra.mxu0 %v238
    %977 = vmatprep.mubr.f32.mxu0 %v487
    %978 = vmatmul.mubr.f32.gmra.mrb[0].mxu0 %v485
    %v979 = vpop.f32.mrb[0].mxu0
    %v980 = vadd.f32 %v910, %v979
    %v981 = vpop.f32.mrb[0].mxu0
    %982 = vdwg.mxu0
    %983 = vmatprep.subr.mxu0 0.0
    %984 = vmatpush1.msra.mxu0 %v239
    %985 = vmatprep.subr.mxu0 0.0
    %986 = vmatpush1.msra.mxu0 %v240
    %987 = vmatprep.subr.mxu0 0.0
    %988 = vmatpush1.msra.mxu0 %v241
    %989 = vmatprep.subr.mxu0 0.0
    %990 = vmatpush1.msra.mxu0 %v242
    %991 = vmatprep.subr.mxu0 0.0
    %992 = vmatpush1.msra.mxu0 %v243
    %993 = vmatprep.subr.mxu0 0.0
    %994 = vmatpush1.msra.mxu0 %v244
    %995 = vmatprep.subr.mxu0 0.0
    %996 = vmatpush1.msra.mxu0 %v245
    %997 = vmatprep.subr.mxu0 0.0
    %998 = vmatpush1.msra.mxu0 %v246
    %999 = vmatprep.subr.mxu0 0.0
    %1000 = vmatpush1.msra.mxu0 %v247
    %1001 = vmatprep.subr.mxu0 0.0
    %1002 = vmatpush1.msra.mxu0 %v248
    %1003 = vmatprep.subr.mxu0 0.0
    %1004 = vmatpush1.msra.mxu0 %v249
    %1005 = vmatprep.subr.mxu0 0.0
    %1006 = vmatpush1.msra.mxu0 %v250
    %1007 = vmatprep.subr.mxu0 0.0
    %1008 = vmatpush1.msra.mxu0 %v251
    %1009 = vmatprep.subr.mxu0 0.0
    %1010 = vmatpush1.msra.mxu0 %v252
    %1011 = vmatprep.subr.mxu0 0.0
    %1012 = vmatpush1.msra.mxu0 %v253
    %1013 = vmatprep.subr.mxu0 0.0
    %1014 = vmatpush1.msra.mxu0 %v254
    %1015 = vmatprep.subr.mxu0 0.0
    %1016 = vmatpush1.msra.mxu0 %v255
    %1017 = vmatprep.subr.mxu0 0.0
    %1018 = vmatpush1.msra.mxu0 %v256
    %1019 = vmatprep.subr.mxu0 0.0
    %1020 = vmatpush1.msra.mxu0 %v257
    %1021 = vmatprep.subr.mxu0 0.0
    %1022 = vmatpush1.msra.mxu0 %v258
    %1023 = vmatprep.subr.mxu0 0.0
    %1024 = vmatpush1.msra.mxu0 %v259
    %1025 = vmatprep.subr.mxu0 0.0
    %1026 = vmatpush1.msra.mxu0 %v260
    %1027 = vmatprep.subr.mxu0 0.0
    %1028 = vmatpush1.msra.mxu0 %v261
    %1029 = vmatprep.subr.mxu0 0.0
    %1030 = vmatpush1.msra.mxu0 %v262
    %1031 = vmatprep.subr.mxu0 0.0
    %1032 = vmatpush1.msra.mxu0 %v263
    %1033 = vmatprep.subr.mxu0 0.0
    %1034 = vmatpush1.msra.mxu0 %v264
    %1035 = vmatprep.subr.mxu0 0.0
    %1036 = vmatpush1.msra.mxu0 %v265
    %1037 = vmatprep.subr.mxu0 0.0
    %1038 = vmatpush1.msra.mxu0 %v266
    %1039 = vmatprep.subr.mxu0 0.0
    %1040 = vmatpush1.msra.mxu0 %v267
    %1041 = vmatprep.subr.mxu0 0.0
    %1042 = vmatpush1.msra.mxu0 %v268
    %1043 = vmatprep.subr.mxu0 0.0
    %1044 = vmatpush1.msra.mxu0 %v269
    %1045 = vmatprep.subr.mxu0 0.0
    %1046 = vmatpush1.msra.mxu0 %v270
    %1047 = vmatprep.mubr.f32.mxu0 %v503
    %1048 = vmatmul.mubr.f32.gmra.mrb[0].mxu0 %v495
    %v1049 = vpop.f32.mrb[0].mxu0
    %v1050 = vadd.f32 %v980, %v1049
    %v1051 = vpop.f32.mrb[0].mxu0
    %1052 = vdwg.mxu0
    %1053 = vmatprep.subr.mxu0 0.0
    %1054 = vmatpush1.msra.mxu0 %v271
    %1055 = vmatprep.subr.mxu0 0.0
    %1056 = vmatpush1.msra.mxu0 %v272
    %1057 = vmatprep.subr.mxu0 0.0
    %1058 = vmatpush1.msra.mxu0 %v273
    %1059 = vmatprep.subr.mxu0 0.0
    %1060 = vmatpush1.msra.mxu0 %v274
    %1061 = vmatprep.subr.mxu0 0.0
    %1062 = vmatpush1.msra.mxu0 %v275
    %1063 = vmatprep.subr.mxu0 0.0
    %1064 = vmatpush1.msra.mxu0 %v276
    %1065 = vmatprep.subr.mxu0 0.0
    %1066 = vmatpush1.msra.mxu0 %v277
    %1067 = vmatprep.subr.mxu0 0.0
    %1068 = vmatpush1.msra.mxu0 %v278
    %1069 = vmatprep.subr.mxu0 0.0
    %1070 = vmatpush1.msra.mxu0 %v279
    %1071 = vmatprep.subr.mxu0 0.0
    %1072 = vmatpush1.msra.mxu0 %v280
    %1073 = vmatprep.subr.mxu0 0.0
    %1074 = vmatpush1.msra.mxu0 %v281
    %1075 = vmatprep.subr.mxu0 0.0
    %1076 = vmatpush1.msra.mxu0 %v282
    %1077 = vmatprep.subr.mxu0 0.0
    %1078 = vmatpush1.msra.mxu0 %v283
    %1079 = vmatprep.subr.mxu0 0.0
    %1080 = vmatpush1.msra.mxu0 %v284
    %1081 = vmatprep.subr.mxu0 0.0
    %1082 = vmatpush1.msra.mxu0 %v285
    %1083 = vmatprep.subr.mxu0 0.0
    %1084 = vmatpush1.msra.mxu0 %v286
    %1085 = vmatprep.subr.mxu0 0.0
    %1086 = vmatpush1.msra.mxu0 %v287
    %1087 = vmatprep.subr.mxu0 0.0
    %1088 = vmatpush1.msra.mxu0 %v288
    %1089 = vmatprep.subr.mxu0 0.0
    %1090 = vmatpush1.msra.mxu0 %v289
    %1091 = vmatprep.subr.mxu0 0.0
    %1092 = vmatpush1.msra.mxu0 %v290
    %1093 = vmatprep.subr.mxu0 0.0
    %1094 = vmatpush1.msra.mxu0 %v291
    %1095 = vmatprep.subr.mxu0 0.0
    %1096 = vmatpush1.msra.mxu0 %v292
    %1097 = vmatprep.subr.mxu0 0.0
    %1098 = vmatpush1.msra.mxu0 %v293
    %1099 = vmatprep.subr.mxu0 0.0
    %1100 = vmatpush1.msra.mxu0 %v294
    %1101 = vmatprep.subr.mxu0 0.0
    %1102 = vmatpush1.msra.mxu0 %v295
    %1103 = vmatprep.subr.mxu0 0.0
    %1104 = vmatpush1.msra.mxu0 %v296
    %1105 = vmatprep.subr.mxu0 0.0
    %1106 = vmatpush1.msra.mxu0 %v297
    %1107 = vmatprep.subr.mxu0 0.0
    %1108 = vmatpush1.msra.mxu0 %v298
    %1109 = vmatprep.subr.mxu0 0.0
    %1110 = vmatpush1.msra.mxu0 %v299
    %1111 = vmatprep.subr.mxu0 0.0
    %1112 = vmatpush1.msra.mxu0 %v300
    %1113 = vmatprep.subr.mxu0 0.0
    %1114 = vmatpush1.msra.mxu0 %v301
    %1115 = vmatprep.subr.mxu0 0.0
    %1116 = vmatpush1.msra.mxu0 %v302
    %1117 = vmatprep.mubr.f32.mxu0 %v504
    %1118 = vmatmul.mubr.f32.gmra.mrb[0].mxu0 %v502
    %v1119 = vpop.f32.mrb[0].mxu0
    %v1120 = vadd.f32 %v1050, %v1119
    %v1121 = vpop.f32.mrb[0].mxu0
    %1122 = vdwg.mxu0
    %1123 = vmatprep.subr.mxu0 0.0
    %1124 = vmatpush1.msra.mxu0 %v303
    %1125 = vmatprep.subr.mxu0 0.0
    %1126 = vmatpush1.msra.mxu0 %v304
    %1127 = vmatprep.subr.mxu0 0.0
    %1128 = vmatpush1.msra.mxu0 %v305
    %1129 = vmatprep.subr.mxu0 0.0
    %1130 = vmatpush1.msra.mxu0 %v306
    %1131 = vmatprep.subr.mxu0 0.0
    %1132 = vmatpush1.msra.mxu0 %v307
    %1133 = vmatprep.subr.mxu0 0.0
    %1134 = vmatpush1.msra.mxu0 %v308
    %1135 = vmatprep.subr.mxu0 0.0
    %1136 = vmatpush1.msra.mxu0 %v309
    %1137 = vmatprep.subr.mxu0 0.0
    %1138 = vmatpush1.msra.mxu0 %v310
    %1139 = vmatprep.subr.mxu0 0.0
    %1140 = vmatpush1.msra.mxu0 %v311
    %1141 = vmatprep.subr.mxu0 0.0
    %1142 = vmatpush1.msra.mxu0 %v312
    %1143 = vmatprep.subr.mxu0 0.0
    %1144 = vmatpush1.msra.mxu0 %v313
    %1145 = vmatprep.subr.mxu0 0.0
    %1146 = vmatpush1.msra.mxu0 %v314
    %1147 = vmatprep.subr.mxu0 0.0
    %1148 = vmatpush1.msra.mxu0 %v315
    %1149 = vmatprep.subr.mxu0 0.0
    %1150 = vmatpush1.msra.mxu0 %v316
    %1151 = vmatprep.subr.mxu0 0.0
    %1152 = vmatpush1.msra.mxu0 %v317
    %1153 = vmatprep.subr.mxu0 0.0
    %1154 = vmatpush1.msra.mxu0 %v318
    %1155 = vmatprep.subr.mxu0 0.0
    %1156 = vmatpush1.msra.mxu0 %v319
    %1157 = vmatprep.subr.mxu0 0.0
    %1158 = vmatpush1.msra.mxu0 %v320
    %1159 = vmatprep.subr.mxu0 0.0
    %1160 = vmatpush1.msra.mxu0 %v321
    %1161 = vmatprep.subr.mxu0 0.0
    %1162 = vmatpush1.msra.mxu0 %v322
    %1163 = vmatprep.subr.mxu0 0.0
    %1164 = vmatpush1.msra.mxu0 %v323
    %1165 = vmatprep.subr.mxu0 0.0
    %1166 = vmatpush1.msra.mxu0 %v324
    %1167 = vmatprep.subr.mxu0 0.0
    %1168 = vmatpush1.msra.mxu0 %v325
    %1169 = vmatprep.subr.mxu0 0.0
    %1170 = vmatpush1.msra.mxu0 %v326
    %1171 = vmatprep.subr.mxu0 0.0
    %1172 = vmatpush1.msra.mxu0 %v327
    %1173 = vmatprep.subr.mxu0 0.0
    %1174 = vmatpush1.msra.mxu0 %v328
    %1175 = vmatprep.subr.mxu0 0.0
    %1176 = vmatpush1.msra.mxu0 %v329
    %1177 = vmatprep.subr.mxu0 0.0
    %1178 = vmatpush1.msra.mxu0 %v330
    %1179 = vmatprep.subr.mxu0 0.0
    %1180 = vmatpush1.msra.mxu0 %v331
    %1181 = vmatprep.subr.mxu0 0.0
    %1182 = vmatpush1.msra.mxu0 %v332
    %1183 = vmatprep.subr.mxu0 0.0
    %1184 = vmatpush1.msra.mxu0 %v333
    %1185 = vmatprep.subr.mxu0 0.0
    %1186 = vmatpush1.msra.mxu0 %v334
    %1187 = vmatprep.mubr.f32.mxu0 %v520
    %1188 = vmatmul.mubr.f32.gmra.mrb[0].mxu0 %v512
    %v1189 = vpop.f32.mrb[0].mxu0
    %v1190 = vadd.f32 %v1120, %v1189
    %v1191 = vpop.f32.mrb[0].mxu0
    %1192 = vdwg.mxu0
    %1193 = vmatprep.subr.mxu0 0.0
    %1194 = vmatpush1.msra.mxu0 %v335
    %1195 = vmatprep.subr.mxu0 0.0
    %1196 = vmatpush1.msra.mxu0 %v336
    %1197 = vmatprep.subr.mxu0 0.0
    %1198 = vmatpush1.msra.mxu0 %v337
    %1199 = vmatprep.subr.mxu0 0.0
    %1200 = vmatpush1.msra.mxu0 %v338
    %1201 = vmatprep.subr.mxu0 0.0
    %1202 = vmatpush1.msra.mxu0 %v339
    %1203 = vmatprep.subr.mxu0 0.0
    %1204 = vmatpush1.msra.mxu0 %v340
    %1205 = vmatprep.subr.mxu0 0.0
    %1206 = vmatpush1.msra.mxu0 %v341
    %1207 = vmatprep.subr.mxu0 0.0
    %1208 = vmatpush1.msra.mxu0 %v342
    %1209 = vmatprep.subr.mxu0 0.0
    %1210 = vmatpush1.msra.mxu0 %v343
    %1211 = vmatprep.subr.mxu0 0.0
    %1212 = vmatpush1.msra.mxu0 %v344
    %1213 = vmatprep.subr.mxu0 0.0
    %1214 = vmatpush1.msra.mxu0 %v345
    %1215 = vmatprep.subr.mxu0 0.0
    %1216 = vmatpush1.msra.mxu0 %v346
    %1217 = vmatprep.subr.mxu0 0.0
    %1218 = vmatpush1.msra.mxu0 %v347
    %1219 = vmatprep.subr.mxu0 0.0
    %1220 = vmatpush1.msra.mxu0 %v348
    %1221 = vmatprep.subr.mxu0 0.0
    %1222 = vmatpush1.msra.mxu0 %v349
    %1223 = vmatprep.subr.mxu0 0.0
    %1224 = vmatpush1.msra.mxu0 %v350
    %1225 = vmatprep.subr.mxu0 0.0
    %1226 = vmatpush1.msra.mxu0 %v351
    %1227 = vmatprep.subr.mxu0 0.0
    %1228 = vmatpush1.msra.mxu0 %v352
    %1229 = vmatprep.subr.mxu0 0.0
    %1230 = vmatpush1.msra.mxu0 %v353
    %1231 = vmatprep.subr.mxu0 0.0
    %1232 = vmatpush1.msra.mxu0 %v354
    %1233 = vmatprep.subr.mxu0 0.0
    %1234 = vmatpush1.msra.mxu0 %v355
    %1235 = vmatprep.subr.mxu0 0.0
    %1236 = vmatpush1.msra.mxu0 %v356
    %1237 = vmatprep.subr.mxu0 0.0
    %1238 = vmatpush1.msra.mxu0 %v357
    %1239 = vmatprep.subr.mxu0 0.0
    %1240 = vmatpush1.msra.mxu0 %v358
    %1241 = vmatprep.subr.mxu0 0.0
    %1242 = vmatpush1.msra.mxu0 %v359
    %1243 = vmatprep.subr.mxu0 0.0
    %1244 = vmatpush1.msra.mxu0 %v360
    %1245 = vmatprep.subr.mxu0 0.0
    %1246 = vmatpush1.msra.mxu0 %v361
    %1247 = vmatprep.subr.mxu0 0.0
    %1248 = vmatpush1.msra.mxu0 %v362
    %1249 = vmatprep.subr.mxu0 0.0
    %1250 = vmatpush1.msra.mxu0 %v363
    %1251 = vmatprep.subr.mxu0 0.0
    %1252 = vmatpush1.msra.mxu0 %v364
    %1253 = vmatprep.subr.mxu0 0.0
    %1254 = vmatpush1.msra.mxu0 %v365
    %1255 = vmatprep.subr.mxu0 0.0
    %1256 = vmatpush1.msra.mxu0 %v366
    %1257 = vmatprep.mubr.f32.mxu0 %v521
    %1258 = vmatmul.mubr.f32.gmra.mrb[0].mxu0 %v519
    %v1259 = vpop.f32.mrb[0].mxu0
    %v1260 = vadd.f32 %v1190, %v1259
    %v1261 = vpop.f32.mrb[0].mxu0
    %1262 = vdwg.mxu0
    %1263 = vmatprep.subr.mxu0 0.0
    %1264 = vmatpush1.msra.mxu0 %v367
    %1265 = vmatprep.subr.mxu0 0.0
    %1266 = vmatpush1.msra.mxu0 %v368
    %1267 = vmatprep.subr.mxu0 0.0
    %1268 = vmatpush1.msra.mxu0 %v369
    %1269 = vmatprep.subr.mxu0 0.0
    %1270 = vmatpush1.msra.mxu0 %v370
    %1271 = vmatprep.subr.mxu0 0.0
    %1272 = vmatpush1.msra.mxu0 %v371
    %1273 = vmatprep.subr.mxu0 0.0
    %1274 = vmatpush1.msra.mxu0 %v372
    %1275 = vmatprep.subr.mxu0 0.0
    %1276 = vmatpush1.msra.mxu0 %v373
    %1277 = vmatprep.subr.mxu0 0.0
    %1278 = vmatpush1.msra.mxu0 %v374
    %1279 = vmatprep.subr.mxu0 0.0
    %1280 = vmatpush1.msra.mxu0 %v375
    %1281 = vmatprep.subr.mxu0 0.0
    %1282 = vmatpush1.msra.mxu0 %v376
    %1283 = vmatprep.subr.mxu0 0.0
    %1284 = vmatpush1.msra.mxu0 %v377
    %1285 = vmatprep.subr.mxu0 0.0
    %1286 = vmatpush1.msra.mxu0 %v378
    %1287 = vmatprep.subr.mxu0 0.0
    %1288 = vmatpush1.msra.mxu0 %v379
    %1289 = vmatprep.subr.mxu0 0.0
    %1290 = vmatpush1.msra.mxu0 %v380
    %1291 = vmatprep.subr.mxu0 0.0
    %1292 = vmatpush1.msra.mxu0 %v381
    %1293 = vmatprep.subr.mxu0 0.0
    %1294 = vmatpush1.msra.mxu0 %v382
    %1295 = vmatprep.subr.mxu0 0.0
    %1296 = vmatpush1.msra.mxu0 %v383
    %1297 = vmatprep.subr.mxu0 0.0
    %1298 = vmatpush1.msra.mxu0 %v384
    %1299 = vmatprep.subr.mxu0 0.0
    %1300 = vmatpush1.msra.mxu0 %v385
    %1301 = vmatprep.subr.mxu0 0.0
    %1302 = vmatpush1.msra.mxu0 %v386
    %1303 = vmatprep.subr.mxu0 0.0
    %1304 = vmatpush1.msra.mxu0 %v387
    %1305 = vmatprep.subr.mxu0 0.0
    %1306 = vmatpush1.msra.mxu0 %v388
    %1307 = vmatprep.subr.mxu0 0.0
    %1308 = vmatpush1.msra.mxu0 %v389
    %1309 = vmatprep.subr.mxu0 0.0
    %1310 = vmatpush1.msra.mxu0 %v390
    %1311 = vmatprep.subr.mxu0 0.0
    %1312 = vmatpush1.msra.mxu0 %v391
    %1313 = vmatprep.subr.mxu0 0.0
    %1314 = vmatpush1.msra.mxu0 %v392
    %1315 = vmatprep.subr.mxu0 0.0
    %1316 = vmatpush1.msra.mxu0 %v393
    %1317 = vmatprep.subr.mxu0 0.0
    %1318 = vmatpush1.msra.mxu0 %v394
    %1319 = vmatprep.subr.mxu0 0.0
    %1320 = vmatpush1.msra.mxu0 %v395
    %1321 = vmatprep.subr.mxu0 0.0
    %1322 = vmatpush1.msra.mxu0 %v396
    %1323 = vmatprep.subr.mxu0 0.0
    %1324 = vmatpush1.msra.mxu0 %v397
    %1325 = vmatprep.subr.mxu0 0.0
    %1326 = vmatpush1.msra.mxu0 %v398
    %1327 = vmatprep.mubr.f32.mxu0 %v537
    %1328 = vmatmul.mubr.f32.gmra.mrb[0].mxu0 %v529
    %v1329 = vpop.f32.mrb[0].mxu0
    %v1330 = vadd.f32 %v1260, %v1329
    %v1331 = vpop.f32.mrb[0].mxu0
    %1332 = vdwg.mxu0
    %1333 = vmatprep.subr.mxu0 0.0
    %1334 = vmatpush1.msra.mxu0 %v399
    %1335 = vmatprep.subr.mxu0 0.0
    %1336 = vmatpush1.msra.mxu0 %v400
    %1337 = vmatprep.subr.mxu0 0.0
    %1338 = vmatpush1.msra.mxu0 %v401
    %1339 = vmatprep.subr.mxu0 0.0
    %1340 = vmatpush1.msra.mxu0 %v402
    %1341 = vmatprep.subr.mxu0 0.0
    %1342 = vmatpush1.msra.mxu0 %v403
    %1343 = vmatprep.subr.mxu0 0.0
    %1344 = vmatpush1.msra.mxu0 %v404
    %1345 = vmatprep.subr.mxu0 0.0
    %1346 = vmatpush1.msra.mxu0 %v405
    %1347 = vmatprep.subr.mxu0 0.0
    %1348 = vmatpush1.msra.mxu0 %v406
    %1349 = vmatprep.subr.mxu0 0.0
    %1350 = vmatpush1.msra.mxu0 %v407
    %1351 = vmatprep.subr.mxu0 0.0
    %1352 = vmatpush1.msra.mxu0 %v408
    %1353 = vmatprep.subr.mxu0 0.0
    %1354 = vmatpush1.msra.mxu0 %v409
    %1355 = vmatprep.subr.mxu0 0.0
    %1356 = vmatpush1.msra.mxu0 %v410
    %1357 = vmatprep.subr.mxu0 0.0
    %1358 = vmatpush1.msra.mxu0 %v411
    %1359 = vmatprep.subr.mxu0 0.0
    %1360 = vmatpush1.msra.mxu0 %v412
    %1361 = vmatprep.subr.mxu0 0.0
    %1362 = vmatpush1.msra.mxu0 %v413
    %1363 = vmatprep.subr.mxu0 0.0
    %1364 = vmatpush1.msra.mxu0 %v414
    %1365 = vmatprep.subr.mxu0 0.0
    %1366 = vmatpush1.msra.mxu0 %v415
    %1367 = vmatprep.subr.mxu0 0.0
    %1368 = vmatpush1.msra.mxu0 %v416
    %1369 = vmatprep.subr.mxu0 0.0
    %1370 = vmatpush1.msra.mxu0 %v417
    %1371 = vmatprep.subr.mxu0 0.0
    %1372 = vmatpush1.msra.mxu0 %v418
    %1373 = vmatprep.subr.mxu0 0.0
    %1374 = vmatpush1.msra.mxu0 %v419
    %1375 = vmatprep.subr.mxu0 0.0
    %1376 = vmatpush1.msra.mxu0 %v420
    %1377 = vmatprep.subr.mxu0 0.0
    %1378 = vmatpush1.msra.mxu0 %v421
    %1379 = vmatprep.subr.mxu0 0.0
    %1380 = vmatpush1.msra.mxu0 %v422
    %1381 = vmatprep.subr.mxu0 0.0
    %1382 = vmatpush1.msra.mxu0 %v423
    %1383 = vmatprep.subr.mxu0 0.0
    %1384 = vmatpush1.msra.mxu0 %v424
    %1385 = vmatprep.subr.mxu0 0.0
    %1386 = vmatpush1.msra.mxu0 %v425
    %1387 = vmatprep.subr.mxu0 0.0
    %1388 = vmatpush1.msra.mxu0 %v426
    %1389 = vmatprep.subr.mxu0 0.0
    %1390 = vmatpush1.msra.mxu0 %v427
    %1391 = vmatprep.subr.mxu0 0.0
    %1392 = vmatpush1.msra.mxu0 %v428
    %1393 = vmatprep.subr.mxu0 0.0
    %1394 = vmatpush1.msra.mxu0 %v429
    %1395 = vmatprep.subr.mxu0 0.0
    %1396 = vmatpush1.msra.mxu0 %v430
    %1397 = vmatprep.mubr.f32.mxu0 %v538
    %1398 = vmatmul.mubr.f32.gmra.mrb[0].mxu0 %v536
    %v1399 = vpop.f32.mrb[0].mxu0
    %v1400 = vadd.f32 %v1330, %v1399
    %v1401 = vpop.f32.mrb[0].mxu0
    %1402 = vdwg.mxu0
    %v1403 = vld [vmem:[#allocation5] sm:$0x1]
    %v1405 = vlaneseq
    %v1406 = vshrl.u32 %v1405, 7
    %v1407 = vsub.s32 0, %v1406
    %v1408 = vrot.slane %v1403, %v1407
    %v1410 = vadd.f32 %v1400, %v1408
    %vm1411 = vcmask 74752
    %1412 = vst.msk [vmem:[#allocation7] sm:$0x3] %vm1411, %v1410
    // Predicated region
    $region22: #{svm_forward.1} parent=1 // pred_check
      _
    $region23: #{svm_forward.1} parent=1 // pred_check_branch
      %1414 = sbr.rel (0) target = $region25
    $region24: #{svm_forward.1} parent=1 // pred_region
      %s1416 = ssub.s32 32, 32
      %1417 = vsyncadd [#allocation4], %s1416
      %s1419 = sshll.u32 [#allocation7], 4
      %s1420 = int_to_ptr.vmem [resolvable:$true] %s1419
      %1422 = dma.vmem_to_hbm [thread:$0]  %s1420, 32, %s3, [#allocation4]
    $region25: #{svm_forward.1} parent=1 // pred_fallthru
      _
    // Predicated region
    $region26: #{svm_forward.1} parent=1 // pred_check
      _
    $region27: #{svm_forward.1} parent=1 // pred_check_branch
      %1424 = sbr.rel (0) target = $region29
    $region28: #{svm_forward.1} parent=1 // pred_region
      %1425 = dma.done [#allocation4], 32
    $region29: #{svm_forward.1} parent=1 // pred_fallthru
      _
    %1426 = vsyncpa [#allocation3], 1
    %1427 = vsyncpa [#allocation6], 1
    %1428 = vsyncpa [#allocation4], 1

</llo_original>
